<compile_context>
chip_gen: v7x
topology: tpu7x:2x2x1
jax: 0.10.0
libtpu: 0.0.40
codegen_flags: <defaults>
</compile_context>

<pallas_src>
import functools

import jax
import jax.numpy as jnp
from jax.experimental import pallas as pl
from jax.experimental.pallas import tpu as pltpu

LANE = 128  # TPU lane width / MXU tile width


def _round_up(v, m):
    return ((v + m - 1) // m) * m


def _pad2d(x, rows, cols):
    return jnp.pad(x, ((0, rows - x.shape[0]), (0, cols - x.shape[1])))


def _vmem_limit_bytes():
    """Generation-aware scoped-VMEM limit (headroom below physical VMEM)."""
    phys = 64 * 1024 * 1024  # conservative default (v7x per-TC VMEM)
    try:
        phys = int(pltpu.get_tpu_info().vmem_capacity_bytes)
    except Exception:
        pass
    # ~48 MiB on v7x (64 MiB physical); ~96-100 MiB on v5e / v6e (128 MiB).
    return min(int(phys * 3 // 4), 100 * 1024 * 1024)


def _tile_bytes(tm, tk, f_agg, f_out, out_bytes):
    """Rough per-step VMEM footprint (double-buffered pipelined operands)."""
    a = 2 * tm * tk * 2                 # (A+I) tile, bf16
    y = 2 * tk * f_agg * 2              # pre-scaled feature tile, bf16
    w = 2 * f_agg * f_out * 2           # W (grid-invariant but 2 buffers)
    b = 2 * 8 * f_out * 4               # bias (sublane-padded)
    d = 2 * tm * LANE * 4               # (tm, 1) dinv block is lane-inflated
    acc = tm * f_agg * 4                # f32 accumulator scratch
    o = 2 * tm * f_out * out_bytes      # output tile
    return a + y + w + b + d + acc + o


def _pick_tiles(n_pad, f_agg, f_out, out_bytes, vmem_limit):
    """Largest (tm, tk) fitting the VMEM budget; >= 2 row tiles when possible."""
    budget = vmem_limit - 4 * 1024 * 1024
    cands = [c for c in (2048, 1024, 512, 256, 128) if n_pad % c == 0]
    if not cands:
        cands = [n_pad]
    # Guarantee >= 2 row tiles so the "parallel" axis feeds both v7x TCs.
    tm_cands = [c for c in cands if n_pad // c >= 2] or cands
    for tm in tm_cands:
        for tk in cands:
            if _tile_bytes(tm, tk, f_agg, f_out, out_bytes) <= budget:
                return tm, tk
    return cands[-1], cands[-1]


def _gcn_finalize(acc, dinv, w_ref, b_ref, apply_relu, fold_src_scale, out_dtype):
    """Epilogue: optional W matmul, destination scale, bias, ReLU, store cast."""
    if w_ref is not None:
        z = jnp.dot(acc.astype(jnp.bfloat16), w_ref[...],
                    preferred_element_type=jnp.float32)
    else:
        z = acc
    # Destination-side D^{-1/2}: per-row scalar, commutes with the W matmul,
    # applied on the (tm, f_out) tile as suggested by the perf review.
    z = z * dinv + b_ref[...]
    if apply_relu:
        z = jnp.maximum(z, 0.0)
    if fold_src_scale:
        # Fold the NEXT layer's source-side D^{-1/2} into this store so H never
        # needs a separate rescale pass.
        z = z * dinv
    return z.astype(out_dtype)


def gcn_kernel_w(a_ref, y_ref, dinv_ref, w_ref, b_ref, o_ref, acc_ref, *,
                 apply_relu, fold_src_scale):
    """K-tiled aggregation + in-kernel feature transform."""
    k = pl.program_id(1)

    @pl.when(k == 0)
    def _():
        acc_ref[...] = jnp.zeros_like(acc_ref)

    acc_ref[...] += jnp.dot(a_ref[...], y_ref[...],
                            preferred_element_type=jnp.float32)

    @pl.when(k == pl.num_programs(1) - 1)
    def _():
        o_ref[...] = _gcn_finalize(acc_ref[...], dinv_ref[...], w_ref, b_ref,
                                   apply_relu, fold_src_scale, o_ref.dtype)


def gcn_kernel_now(a_ref, y_ref, dinv_ref, b_ref, o_ref, acc_ref, *,
                   apply_relu, fold_src_scale):
    """K-tiled aggregation; feature transform already done in the wrapper."""
    k = pl.program_id(1)

    @pl.when(k == 0)
    def _():
        acc_ref[...] = jnp.zeros_like(acc_ref)

    acc_ref[...] += jnp.dot(a_ref[...], y_ref[...],
                            preferred_element_type=jnp.float32)

    @pl.when(k == pl.num_programs(1) - 1)
    def _():
        o_ref[...] = _gcn_finalize(acc_ref[...], dinv_ref[...], None, b_ref,
                                   apply_relu, fold_src_scale, o_ref.dtype)


def gcn_layer(a_bf, y_bf, dinv_rows, w_bf, b_f32, *, apply_relu,
              fold_src_scale, out_dtype):
    """One GCNConv layer: o = [dinv*]([relu](dinv * (A+I) @ Y [@ W] + b))."""
    n_pad = a_bf.shape[0]
    f_agg = y_bf.shape[1]
    f_out = b_f32.shape[1]
    out_bytes = jnp.dtype(out_dtype).itemsize

    vmem_limit = _vmem_limit_bytes()
    tm, tk = _pick_tiles(n_pad, f_agg, f_out, out_bytes, vmem_limit)
    grid = (n_pad // tm, n_pad // tk)

    in_specs = [
        pl.BlockSpec((tm, tk), lambda i, k: (i, k)),      # (A+I) tile, streamed
        pl.BlockSpec((tk, f_agg), lambda i, k: (k, 0)),   # pre-scaled features
        pl.BlockSpec((tm, 1), lambda i, k: (i, 0)),       # dinv for this row tile
    ]
    inputs = [a_bf, y_bf, dinv_rows]
    flops = 2 * n_pad * n_pad * f_agg
    if w_bf is not None:
        in_specs.append(pl.BlockSpec((f_agg, f_out), lambda i, k: (0, 0)))  # W
        inputs.append(w_bf)
        kernel = functools.partial(gcn_kernel_w, apply_relu=apply_relu,
                                   fold_src_scale=fold_src_scale)
        flops += 2 * n_pad * f_agg * f_out
    else:
        kernel = functools.partial(gcn_kernel_now, apply_relu=apply_relu,
                                   fold_src_scale=fold_src_scale)
    in_specs.append(pl.BlockSpec((1, f_out), lambda i, k: (0, 0)))           # bias
    inputs.append(b_f32)

    bytes_accessed = (n_pad * n_pad * 2                        # A stream (binding)
                      + (n_pad // tm) * n_pad * f_agg * 2      # Y re-streamed/tile
                      + n_pad * f_out * out_bytes              # output
                      + f_agg * f_out * 2 + n_pad * 4)         # W + dinv

    return pl.pallas_call(
        kernel,
        out_shape=jax.ShapeDtypeStruct((n_pad, f_out), out_dtype),
        grid=grid,
        in_specs=in_specs,
        out_specs=pl.BlockSpec((tm, f_out), lambda i, k: (i, 0)),
        scratch_shapes=[pltpu.VMEM((tm, f_agg), jnp.float32)],
        compiler_params=pltpu.CompilerParams(
            dimension_semantics=("parallel", "arbitrary"),
            vmem_limit_bytes=vmem_limit,
        ),
        cost_estimate=pl.CostEstimate(
            flops=flops, transcendentals=0, bytes_accessed=bytes_accessed),
    )(*inputs)


def link_prediction_forward(x, edge_index, params):
    """Equivalent of LinkPredictionModel.forward: returns (z, edge_index)."""
    w1, b1, w2, b2 = params
    n, f_in = x.shape
    hidden = w1.shape[1]
    out_c = w2.shape[1]

    n_pad = _round_up(n, LANE)
    fi_pad = _round_up(f_in, LANE)
    h_pad = _round_up(hidden, LANE)
    o_pad = _round_up(out_c, LANE)

    # A + I (unnormalized, directed — matches the in-file reference) and D^{-1/2}.
    src, dst = edge_index[0], edge_index[1]
    a = jnp.zeros((n, n), jnp.float32).at[dst, src].add(1.0)
    a = a + jnp.eye(n, dtype=jnp.float32)
    deg = jnp.sum(a, axis=1)                      # in-degree incl. self loop (>=1)
    dinv = jax.lax.rsqrt(deg)

    a_bf = _pad2d(a, n_pad, n_pad).astype(jnp.bfloat16)
    dinv_rows = _pad2d(dinv[:, None], n_pad, 1)   # f32; padded rows -> 0

    # ---- layer 1 ---------------------------------------------------------
    # Source-side D^{-1/2} hoisted out of the kernel (one-shot N x f_in op).
    xs = x * dinv[:, None]
    if fi_pad > h_pad:
        # Wide raw features: do the feature transform in the wrapper so the
        # N^2 aggregation only pushes the narrower hidden width.
        y1 = _pad2d(xs @ w1, n_pad, h_pad).astype(jnp.bfloat16)
        w1_feed = None
    else:
        y1 = _pad2d(xs, n_pad, fi_pad).astype(jnp.bfloat16)
        w1_feed = _pad2d(w1, fi_pad, h_pad).astype(jnp.bfloat16)
    b1_f32 = _pad2d(b1.reshape(1, -1), 1, h_pad)

    # conv1 + ReLU; the next layer's source-side D^{-1/2} is folded into this
    # layer's epilogue (fold_src_scale=True) so H needs no rescale pass.
    h = gcn_layer(a_bf, y1, dinv_rows, w1_feed, b1_f32,
                  apply_relu=True, fold_src_scale=True, out_dtype=jnp.bfloat16)

    # F.dropout(p=0.5, training=False) -> identity (inference semantics).
    # TODO(synk): training-mode dropout (pltpu.prng_* masking) intentionally omitted.

    # ---- layer 2 ---------------------------------------------------------
    if h_pad > o_pad:
        y2 = (h.astype(jnp.float32) @ _pad2d(w2, h_pad, o_pad)).astype(jnp.bfloat16)
        w2_feed = None
    else:
        y2 = h
        w2_feed = _pad2d(w2, h_pad, o_pad).astype(jnp.bfloat16)
    b2_f32 = _pad2d(b2.reshape(1, -1), 1, o_pad)

    z_pad = gcn_layer(a_bf, y2, dinv_rows, w2_feed, b2_f32,
                      apply_relu=False, fold_src_scale=False,
                      out_dtype=jnp.float32)
    z = z_pad[:n, :out_c]
    return z, edge_index


def reference_forward(x, edge_index, params):
    """Pure-JAX f32 reference of the same math (correctness check)."""
    w1, b1, w2, b2 = params
    n = x.shape[0]
    src, dst = edge_index[0], edge_index[1]
    a = jnp.zeros((n, n), jnp.float32).at[dst, src].add(1.0)
    a = a + jnp.eye(n, dtype=jnp.float32)
    deg = jnp.sum(a, axis=1)
    dinv = jax.lax.rsqrt(deg)
    a_hat = dinv[:, None] * a * dinv[None, :]
    h = jnp.maximum(a_hat @ (x @ w1) + b1, 0.0)
    z = a_hat @ (h @ w2) + b2
    return z


def glorot(key, shape):
    fan_in, fan_out = shape
    limit = jnp.sqrt(6.0 / (fan_in + fan_out))
    return jax.random.uniform(key, shape, jnp.float32, -limit, limit)


if __name__ == "__main__":
    # Small synthetic graph: N nodes, E directed edges.
    N, E = 64, 128
    in_channels, hidden_channels, out_channels = 16, 32, 16

    key = jax.random.PRNGKey(0)
    kx, ks, kd, kw1, kw2 = jax.random.split(key, 5)

    x = jax.random.normal(kx, (N, in_channels), jnp.float32)
    src = jax.random.randint(ks, (E,), 0, N, jnp.int32)
    dst = jax.random.randint(kd, (E,), 0, N, jnp.int32)
    dst = jnp.where(src == dst, (dst + 1) % N, dst)  # avoid pre-existing self loops
    edge_index = jnp.stack([src, dst], axis=0)       # [2, E]

    # GCNConv params (PyG default: glorot weights, zero bias).
    w1 = glorot(kw1, (in_channels, hidden_channels))
    b1 = jnp.zeros((hidden_channels,), jnp.float32)
    w2 = glorot(kw2, (hidden_channels, out_channels))
    b2 = jnp.zeros((out_channels,), jnp.float32)
    params = (w1, b1, w2, b2)

    fwd = jax.jit(link_prediction_forward)
    z, ei_out = fwd(x, edge_index, params)
    z = jax.block_until_ready(z)

    z_ref = reference_forward(x, edge_index, params)
    assert z.shape == (N, out_channels)
    assert ei_out.shape == (2, E)
    # bf16 MXU feeds with f32 accumulation -> looser tolerance than pure f32.
    assert jnp.allclose(z, z_ref, atol=2e-2, rtol=2e-2), float(
        jnp.max(jnp.abs(z - z_ref)))

    print("KERNEL_OK")
</pallas_src>

<mosaic_0001>
module attributes {stable_mosaic.version = 11 : i64} {
  func.func private @main(%arg0: i32) attributes {dimension_semantics = [#tpu.dimension_semantics<core_parallel>], iteration_bounds = array<i64: 2>, tpu.core_type = #tpu.core_type<sc_scalar_subcore>, window_params = []} {
    return
  }
}

module attributes {stable_mosaic.version = 11 : i64} {
  func.func private @main(%arg0: i32) attributes {dimension_semantics = [#tpu.dimension_semantics<core_parallel>], iteration_bounds = array<i64: 2>, tpu.core_type = #tpu.core_type<sc_scalar_subcore>, window_params = []} {
    return
  }
}

module attributes {stable_mosaic.version = 11 : i64} {
  func.func @gcn_kernel_w(%arg0: i32, %arg1: i32, %arg2: memref<128x128xbf16, #tpu.memory_space<vmem>>, %arg3: memref<128x128xbf16, #tpu.memory_space<vmem>>, %arg4: memref<128x1xf32, #tpu.memory_space<vmem>>, %arg5: memref<128x128xbf16, #tpu.memory_space<vmem>>, %arg6: memref<1x128xf32, #tpu.memory_space<vmem>>, %arg7: memref<128x128xf32, #tpu.memory_space<vmem>>, %arg8: memref<128x128xf32, #tpu.memory_space<vmem>>) attributes {dimension_semantics = [#tpu.dimension_semantics<parallel>, #tpu.dimension_semantics<arbitrary>], iteration_bounds = array<i64: 1, 1>, scalar_prefetch = 0 : i64, scratch_operands = 1 : i64, tpu.core_type = #tpu.core_type<tc>, window_params = [{transform_indices = @transform_0, window_bounds = array<i64: 128, 128>}, {transform_indices = @transform_1, window_bounds = array<i64: 128, 128>}, {transform_indices = @transform_2, window_bounds = array<i64: 128, 1>}, {pipeline_mode = #tpu.pipeline_mode<synchronous>, transform_indices = @transform_3, window_bounds = array<i64: 128, 128>}, {pipeline_mode = #tpu.pipeline_mode<synchronous>, transform_indices = @transform_4, window_bounds = array<i64: 1, 128>}, {transform_indices = @transform_5, window_bounds = array<i64: 128, 128>}]} {
    %c0_i32 = arith.constant 0 : i32
    %0 = arith.cmpi eq, %arg1, %c0_i32 : i32
    %1 = arith.extui %0 : i1 to i32
    %c0_i32_0 = arith.constant 0 : i32
    %2 = arith.cmpi ne, %1, %c0_i32_0 : i32
    scf.if %2 {
      %cst_10 = arith.constant 0.000000e+00 : f32
      %12 = vector.broadcast %cst_10 : f32 to vector<128x128xf32>
      %c0_11 = arith.constant 0 : index
      %c0_12 = arith.constant 0 : index
      %13 = vector.load %arg8[%c0_11, %c0_12] : memref<128x128xf32, #tpu.memory_space<vmem>>, vector<128x128xf32>
      tpu.vector_store %arg8[%c0_11, %c0_12], %12 {strides = array<i32>} : memref<128x128xf32, #tpu.memory_space<vmem>>, vector<128x128xf32>,
    } else {
    }
    %c0 = arith.constant 0 : index
    %c0_1 = arith.constant 0 : index
    %3 = vector.load %arg8[%c0, %c0_1] : memref<128x128xf32, #tpu.memory_space<vmem>>, vector<128x128xf32>
    %c0_2 = arith.constant 0 : index
    %c0_3 = arith.constant 0 : index
    %4 = vector.load %arg2[%c0_2, %c0_3] : memref<128x128xbf16, #tpu.memory_space<vmem>>, vector<128x128xbf16>
    %c0_4 = arith.constant 0 : index
    %c0_5 = arith.constant 0 : index
    %5 = vector.load %arg3[%c0_4, %c0_5] : memref<128x128xbf16, #tpu.memory_space<vmem>>, vector<128x128xbf16>
    %cst = arith.constant dense<0.000000e+00> : vector<128x128xf32>
    %6 = tpu.matmul %4, %5, %cst {dimension_numbers = #tpu.dot_dimension_numbers<[1], [0], [0], [1], [0, 0, 1, 1], [], []>} : vector<128x128xbf16>, vector<128x128xbf16>, vector<128x128xf32> -> vector<128x128xf32>
    %7 = arith.addf %3, %6 : vector<128x128xf32>
    %c0_6 = arith.constant 0 : index
    %c0_7 = arith.constant 0 : index
    %8 = vector.load %arg8[%c0_6, %c0_7] : memref<128x128xf32, #tpu.memory_space<vmem>>, vector<128x128xf32>
    tpu.vector_store %arg8[%c0_6, %c0_7], %7 {strides = array<i32>} : memref<128x128xf32, #tpu.memory_space<vmem>>, vector<128x128xf32>,
    %c0_i32_8 = arith.constant 0 : i32
    %9 = arith.cmpi eq, %arg1, %c0_i32_8 : i32
    %10 = arith.extui %9 : i1 to i32
    %c0_i32_9 = arith.constant 0 : i32
    %11 = arith.cmpi ne, %10, %c0_i32_9 : i32
    scf.if %11 {
      %c0_10 = arith.constant 0 : index
      %c0_11 = arith.constant 0 : index
      %12 = vector.load %arg8[%c0_10, %c0_11] : memref<128x128xf32, #tpu.memory_space<vmem>>, vector<128x128xf32>
      %c0_12 = arith.constant 0 : index
      %c0_13 = arith.constant 0 : index
      %13 = vector.load %arg4[%c0_12, %c0_13] : memref<128x1xf32, #tpu.memory_space<vmem>>, vector<128x1xf32>
      %14 = arith.truncf %12 : vector<128x128xf32> to vector<128x128xbf16>
      %c0_14 = arith.constant 0 : index
      %c0_15 = arith.constant 0 : index
      %15 = vector.load %arg5[%c0_14, %c0_15] : memref<128x128xbf16, #tpu.memory_space<vmem>>, vector<128x128xbf16>
      %cst_16 = arith.constant dense<0.000000e+00> : vector<128x128xf32>
      %16 = tpu.matmul %14, %15, %cst_16 {dimension_numbers = #tpu.dot_dimension_numbers<[1], [0], [0], [1], [0, 0, 1, 1], [], []>} : vector<128x128xbf16>, vector<128x128xbf16>, vector<128x128xf32> -> vector<128x128xf32>
      %17 = vector.broadcast %13 : vector<128x1xf32> to vector<128x128xf32>
      %18 = arith.mulf %16, %17 : vector<128x128xf32>
      %c0_17 = arith.constant 0 : index
      %c0_18 = arith.constant 0 : index
      %19 = vector.load %arg6[%c0_17, %c0_18] : memref<1x128xf32, #tpu.memory_space<vmem>>, vector<1x128xf32>
      %20 = vector.broadcast %19 : vector<1x128xf32> to vector<128x128xf32>
      %21 = arith.addf %18, %20 : vector<128x128xf32>
      %c0_19 = arith.constant 0 : index
      %c0_20 = arith.constant 0 : index
      %22 = vector.load %arg7[%c0_19, %c0_20] : memref<128x128xf32, #tpu.memory_space<vmem>>, vector<128x128xf32>
      tpu.vector_store %arg7[%c0_19, %c0_20], %21 {strides = array<i32>} : memref<128x128xf32, #tpu.memory_space<vmem>>, vector<128x128xf32>,
    } else {
    }
    return
  }
  func.func @transform_0(%arg0: i32, %arg1: i32) -> (i32, i32) {
    %c0_i32 = arith.constant 0 : i32
    return %arg0, %arg1 : i32, i32
  }
  func.func @transform_1(%arg0: i32, %arg1: i32) -> (i32, i32) {
    %c0_i32 = arith.constant 0 : i32
    %c0_i32_0 = arith.constant 0 : i32
    return %arg1, %c0_i32 : i32, i32
  }
  func.func @transform_2(%arg0: i32, %arg1: i32) -> (i32, i32) {
    %c0_i32 = arith.constant 0 : i32
    %c0_i32_0 = arith.constant 0 : i32
    return %arg0, %c0_i32 : i32, i32
  }
  func.func @transform_3(%arg0: i32, %arg1: i32) -> (i32, i32) {
    %c0_i32 = arith.constant 0 : i32
    %c0_i32_0 = arith.constant 0 : i32
    %c0_i32_1 = arith.constant 0 : i32
    return %c0_i32, %c0_i32_0 : i32, i32
  }
  func.func @transform_4(%arg0: i32, %arg1: i32) -> (i32, i32) {
    %c0_i32 = arith.constant 0 : i32
    %c0_i32_0 = arith.constant 0 : i32
    %c0_i32_1 = arith.constant 0 : i32
    return %c0_i32, %c0_i32_0 : i32, i32
  }
  func.func @transform_5(%arg0: i32, %arg1: i32) -> (i32, i32) {
    %c0_i32 = arith.constant 0 : i32
    %c0_i32_0 = arith.constant 0 : i32
    return %arg0, %c0_i32 : i32, i32
  }
}

module attributes {stable_mosaic.version = 11 : i64} {
  func.func @gcn_kernel_w(%arg0: i32, %arg1: i32, %arg2: memref<128x128xbf16, #tpu.memory_space<vmem>>, %arg3: memref<128x128xbf16, #tpu.memory_space<vmem>>, %arg4: memref<128x1xf32, #tpu.memory_space<vmem>>, %arg5: memref<128x128xbf16, #tpu.memory_space<vmem>>, %arg6: memref<1x128xf32, #tpu.memory_space<vmem>>, %arg7: memref<128x128xbf16, #tpu.memory_space<vmem>>, %arg8: memref<128x128xf32, #tpu.memory_space<vmem>>) attributes {dimension_semantics = [#tpu.dimension_semantics<parallel>, #tpu.dimension_semantics<arbitrary>], iteration_bounds = array<i64: 1, 1>, scalar_prefetch = 0 : i64, scratch_operands = 1 : i64, tpu.core_type = #tpu.core_type<tc>, window_params = [{transform_indices = @transform_0, window_bounds = array<i64: 128, 128>}, {transform_indices = @transform_1, window_bounds = array<i64: 128, 128>}, {transform_indices = @transform_2, window_bounds = array<i64: 128, 1>}, {pipeline_mode = #tpu.pipeline_mode<synchronous>, transform_indices = @transform_3, window_bounds = array<i64: 128, 128>}, {pipeline_mode = #tpu.pipeline_mode<synchronous>, transform_indices = @transform_4, window_bounds = array<i64: 1, 128>}, {transform_indices = @transform_5, window_bounds = array<i64: 128, 128>}]} {
    %c0_i32 = arith.constant 0 : i32
    %0 = arith.cmpi eq, %arg1, %c0_i32 : i32
    %1 = arith.extui %0 : i1 to i32
    %c0_i32_0 = arith.constant 0 : i32
    %2 = arith.cmpi ne, %1, %c0_i32_0 : i32
    scf.if %2 {
      %cst_10 = arith.constant 0.000000e+00 : f32
      %12 = vector.broadcast %cst_10 : f32 to vector<128x128xf32>
      %c0_11 = arith.constant 0 : index
      %c0_12 = arith.constant 0 : index
      %13 = vector.load %arg8[%c0_11, %c0_12] : memref<128x128xf32, #tpu.memory_space<vmem>>, vector<128x128xf32>
      tpu.vector_store %arg8[%c0_11, %c0_12], %12 {strides = array<i32>} : memref<128x128xf32, #tpu.memory_space<vmem>>, vector<128x128xf32>,
    } else {
    }
    %c0 = arith.constant 0 : index
    %c0_1 = arith.constant 0 : index
    %3 = vector.load %arg8[%c0, %c0_1] : memref<128x128xf32, #tpu.memory_space<vmem>>, vector<128x128xf32>
    %c0_2 = arith.constant 0 : index
    %c0_3 = arith.constant 0 : index
    %4 = vector.load %arg2[%c0_2, %c0_3] : memref<128x128xbf16, #tpu.memory_space<vmem>>, vector<128x128xbf16>
    %c0_4 = arith.constant 0 : index
    %c0_5 = arith.constant 0 : index
    %5 = vector.load %arg3[%c0_4, %c0_5] : memref<128x128xbf16, #tpu.memory_space<vmem>>, vector<128x128xbf16>
    %cst = arith.constant dense<0.000000e+00> : vector<128x128xf32>
    %6 = tpu.matmul %4, %5, %cst {dimension_numbers = #tpu.dot_dimension_numbers<[1], [0], [0], [1], [0, 0, 1, 1], [], []>} : vector<128x128xbf16>, vector<128x128xbf16>, vector<128x128xf32> -> vector<128x128xf32>
    %7 = arith.addf %3, %6 : vector<128x128xf32>
    %c0_6 = arith.constant 0 : index
    %c0_7 = arith.constant 0 : index
    %8 = vector.load %arg8[%c0_6, %c0_7] : memref<128x128xf32, #tpu.memory_space<vmem>>, vector<128x128xf32>
    tpu.vector_store %arg8[%c0_6, %c0_7], %7 {strides = array<i32>} : memref<128x128xf32, #tpu.memory_space<vmem>>, vector<128x128xf32>,
    %c0_i32_8 = arith.constant 0 : i32
    %9 = arith.cmpi eq, %arg1, %c0_i32_8 : i32
    %10 = arith.extui %9 : i1 to i32
    %c0_i32_9 = arith.constant 0 : i32
    %11 = arith.cmpi ne, %10, %c0_i32_9 : i32
    scf.if %11 {
      %c0_10 = arith.constant 0 : index
      %c0_11 = arith.constant 0 : index
      %12 = vector.load %arg8[%c0_10, %c0_11] : memref<128x128xf32, #tpu.memory_space<vmem>>, vector<128x128xf32>
      %c0_12 = arith.constant 0 : index
      %c0_13 = arith.constant 0 : index
      %13 = vector.load %arg4[%c0_12, %c0_13] : memref<128x1xf32, #tpu.memory_space<vmem>>, vector<128x1xf32>
      %14 = arith.truncf %12 : vector<128x128xf32> to vector<128x128xbf16>
      %c0_14 = arith.constant 0 : index
      %c0_15 = arith.constant 0 : index
      %15 = vector.load %arg5[%c0_14, %c0_15] : memref<128x128xbf16, #tpu.memory_space<vmem>>, vector<128x128xbf16>
      %cst_16 = arith.constant dense<0.000000e+00> : vector<128x128xf32>
      %16 = tpu.matmul %14, %15, %cst_16 {dimension_numbers = #tpu.dot_dimension_numbers<[1], [0], [0], [1], [0, 0, 1, 1], [], []>} : vector<128x128xbf16>, vector<128x128xbf16>, vector<128x128xf32> -> vector<128x128xf32>
      %17 = vector.broadcast %13 : vector<128x1xf32> to vector<128x128xf32>
      %18 = arith.mulf %16, %17 : vector<128x128xf32>
      %c0_17 = arith.constant 0 : index
      %c0_18 = arith.constant 0 : index
      %19 = vector.load %arg6[%c0_17, %c0_18] : memref<1x128xf32, #tpu.memory_space<vmem>>, vector<1x128xf32>
      %20 = vector.broadcast %19 : vector<1x128xf32> to vector<128x128xf32>
      %21 = arith.addf %18, %20 : vector<128x128xf32>
      %cst_19 = arith.constant 0.000000e+00 : f32
      %22 = vector.broadcast %cst_19 : f32 to vector<128x128xf32>
      %23 = arith.maximumf %21, %22 : vector<128x128xf32>
      %24 = vector.broadcast %13 : vector<128x1xf32> to vector<128x128xf32>
      %25 = arith.mulf %23, %24 : vector<128x128xf32>
      %26 = arith.truncf %25 : vector<128x128xf32> to vector<128x128xbf16>
      %c0_20 = arith.constant 0 : index
      %c0_21 = arith.constant 0 : index
      %27 = vector.load %arg7[%c0_20, %c0_21] : memref<128x128xbf16, #tpu.memory_space<vmem>>, vector<128x128xbf16>
      tpu.vector_store %arg7[%c0_20, %c0_21], %26 {strides = array<i32>} : memref<128x128xbf16, #tpu.memory_space<vmem>>, vector<128x128xbf16>,
    } else {
    }
    return
  }
  func.func @transform_0(%arg0: i32, %arg1: i32) -> (i32, i32) {
    %c0_i32 = arith.constant 0 : i32
    return %arg0, %arg1 : i32, i32
  }
  func.func @transform_1(%arg0: i32, %arg1: i32) -> (i32, i32) {
    %c0_i32 = arith.constant 0 : i32
    %c0_i32_0 = arith.constant 0 : i32
    return %arg1, %c0_i32 : i32, i32
  }
  func.func @transform_2(%arg0: i32, %arg1: i32) -> (i32, i32) {
    %c0_i32 = arith.constant 0 : i32
    %c0_i32_0 = arith.constant 0 : i32
    return %arg0, %c0_i32 : i32, i32
  }
  func.func @transform_3(%arg0: i32, %arg1: i32) -> (i32, i32) {
    %c0_i32 = arith.constant 0 : i32
    %c0_i32_0 = arith.constant 0 : i32
    %c0_i32_1 = arith.constant 0 : i32
    return %c0_i32, %c0_i32_0 : i32, i32
  }
  func.func @transform_4(%arg0: i32, %arg1: i32) -> (i32, i32) {
    %c0_i32 = arith.constant 0 : i32
    %c0_i32_0 = arith.constant 0 : i32
    %c0_i32_1 = arith.constant 0 : i32
    return %c0_i32, %c0_i32_0 : i32, i32
  }
  func.func @transform_5(%arg0: i32, %arg1: i32) -> (i32, i32) {
    %c0_i32 = arith.constant 0 : i32
    %c0_i32_0 = arith.constant 0 : i32
    return %arg0, %c0_i32 : i32, i32
  }
}

</mosaic_0001>

<llo_original>
// kernel: link_prediction_forward.2
$region0: #{link_prediction_forward.2}
  #allocation0 [shape = 'u32[]', space=smem, size = 0x4, offset = 0x4, fixed_abs, tag = 'smem constant byte address 0x4 - core index']
  #allocation1 [shape = 'u32[144,128]{1,0:T(1,128)}', space=vmem, size = 0x12000, scoped, tag = 'internal scratch']
  #allocation2 [shape = 'f32[128,128]{1,0:T(8,128)}', space=vmem, size = 0x10000, scoped, tag = 'scratch operand']
  %s0 = inlined_call_operand.vmem [shape: bf16[128,128], index: 0, kind: input, shape index: {}]
  %s1 = inlined_call_operand.vmem [shape: bf16[128,128], index: 1, kind: input, shape index: {}]
  %s2 = inlined_call_operand.vmem [shape: f32[128,1], index: 2, kind: input, shape index: {}]
  %s3 = inlined_call_operand.vmem [shape: bf16[128,128], index: 3, kind: input, shape index: {}]
  %s4 = inlined_call_operand.vmem [shape: f32[1,128], index: 4, kind: input, shape index: {}]
  %s5 = inlined_call_operand.vmem [shape: bf16[128,128], index: 5, kind: output, shape index: {}]
  %s6 = sld [smem:[#allocation0]]
  $region38: #{link_prediction_forward.2} parent=0
    _
  %s8 = ssub.s32 1, %s6
  %s9 = scalar_select 0, %s8, %s6
  // Predicated region
  $region2: #{link_prediction_forward.2} parent=0 // pred_check
    _
  $region3: #{link_prediction_forward.2} parent=0 // pred_check_branch
    %11 = sbr.rel (0) target = $region5
  $region4: #{link_prediction_forward.2} parent=0 // pred_region
    _
  $region5: #{link_prediction_forward.2} parent=0 // pred_fallthru
    _
  // Predicated region
  $region6: #{link_prediction_forward.2} parent=0 // pred_check
    _
  $region7: #{link_prediction_forward.2} parent=0 // pred_check_branch
    %13 = sbr.rel (0) target = $region9
  $region8: #{link_prediction_forward.2} parent=0 // pred_region
    _
  $region9: #{link_prediction_forward.2} parent=0 // pred_fallthru
    _
  // Predicated region
  $region10: #{link_prediction_forward.2} parent=0 // pred_check
    _
  $region11: #{link_prediction_forward.2} parent=0 // pred_check_branch
    %15 = sbr.rel (0) target = $region13
  $region12: #{link_prediction_forward.2} parent=0 // pred_region
    _
  $region13: #{link_prediction_forward.2} parent=0 // pred_fallthru
    _
  // Predicated region
  $region14: #{link_prediction_forward.2} parent=0 // pred_check
    _
  $region15: #{link_prediction_forward.2} parent=0 // pred_check_branch
    %17 = sbr.rel (0) target = $region17
  $region16: #{link_prediction_forward.2} parent=0 // pred_region
    _
  $region17: #{link_prediction_forward.2} parent=0 // pred_fallthru
    _
  // Predicated region
  $region18: #{link_prediction_forward.2} parent=0 // pred_check
    _
  $region19: #{link_prediction_forward.2} parent=0 // pred_check_branch
    %19 = sbr.rel (0) target = $region21
  $region20: #{link_prediction_forward.2} parent=0 // pred_region
    _
  $region21: #{link_prediction_forward.2} parent=0 // pred_fallthru
    _
  %p21 = scmp.eq.s32.totalorder 0, 0
  // Predicated region
  $region22: #{link_prediction_forward.2} parent=0 // pred_check
    %p22 = pneg %p21
  $region23: #{link_prediction_forward.2} parent=0 // pred_check_branch
    %24 = sbr.rel (%p22) target = $region25
  $region24: #{link_prediction_forward.2} parent=0 // pred_region
    %25 = vst [vmem:[#allocation2] sm:$0xff] 0.0
    %26 = vst [vmem:[#allocation2 + $0x8] sm:$0xff] 0.0
    %27 = vst [vmem:[#allocation2 + $0x10] sm:$0xff] 0.0
    %28 = vst [vmem:[#allocation2 + $0x18] sm:$0xff] 0.0
    %29 = vst [vmem:[#allocation2 + $0x20] sm:$0xff] 0.0
    %30 = vst [vmem:[#allocation2 + $0x28] sm:$0xff] 0.0
    %31 = vst [vmem:[#allocation2 + $0x30] sm:$0xff] 0.0
    %32 = vst [vmem:[#allocation2 + $0x38] sm:$0xff] 0.0
    %33 = vst [vmem:[#allocation2 + $0x40] sm:$0xff] 0.0
    %34 = vst [vmem:[#allocation2 + $0x48] sm:$0xff] 0.0
    %35 = vst [vmem:[#allocation2 + $0x50] sm:$0xff] 0.0
    %36 = vst [vmem:[#allocation2 + $0x58] sm:$0xff] 0.0
    %37 = vst [vmem:[#allocation2 + $0x60] sm:$0xff] 0.0
    %38 = vst [vmem:[#allocation2 + $0x68] sm:$0xff] 0.0
    %39 = vst [vmem:[#allocation2 + $0x70] sm:$0xff] 0.0
    %40 = vst [vmem:[#allocation2 + $0x78] sm:$0xff] 0.0
  $region25: #{link_prediction_forward.2} parent=0 // pred_fallthru
    _
  %v41 = vld [vmem:[#allocation2] sm:$0xff]
  %v42 = vld [vmem:[#allocation2 + $0x8] sm:$0xff]
  %v43 = vld [vmem:[#allocation2 + $0x10] sm:$0xff]
  %v44 = vld [vmem:[#allocation2 + $0x18] sm:$0xff]
  %v45 = vld [vmem:[#allocation2 + $0x20] sm:$0xff]
  %v46 = vld [vmem:[#allocation2 + $0x28] sm:$0xff]
  %v47 = vld [vmem:[#allocation2 + $0x30] sm:$0xff]
  %v48 = vld [vmem:[#allocation2 + $0x38] sm:$0xff]
  %v49 = vld [vmem:[#allocation2 + $0x40] sm:$0xff]
  %v50 = vld [vmem:[#allocation2 + $0x48] sm:$0xff]
  %v51 = vld [vmem:[#allocation2 + $0x50] sm:$0xff]
  %v52 = vld [vmem:[#allocation2 + $0x58] sm:$0xff]
  %v53 = vld [vmem:[#allocation2 + $0x60] sm:$0xff]
  %v54 = vld [vmem:[#allocation2 + $0x68] sm:$0xff]
  %v55 = vld [vmem:[#allocation2 + $0x70] sm:$0xff]
  %v56 = vld [vmem:[#allocation2 + $0x78] sm:$0xff]
  %v57 = vld [vmem:[%s0] sm:$0xf]
  %v58 = vld [vmem:[%s0 + $0x4] sm:$0xf]
  %v59 = vld [vmem:[%s0 + $0x8] sm:$0xf]
  %v60 = vld [vmem:[%s0 + $0xc] sm:$0xf]
  %v61 = vld [vmem:[%s0 + $0x10] sm:$0xf]
  %v62 = vld [vmem:[%s0 + $0x14] sm:$0xf]
  %v63 = vld [vmem:[%s0 + $0x18] sm:$0xf]
  %v64 = vld [vmem:[%s0 + $0x1c] sm:$0xf]
  %v65 = vld [vmem:[%s0 + $0x20] sm:$0xf]
  %v66 = vld [vmem:[%s0 + $0x24] sm:$0xf]
  %v67 = vld [vmem:[%s0 + $0x28] sm:$0xf]
  %v68 = vld [vmem:[%s0 + $0x2c] sm:$0xf]
  %v69 = vld [vmem:[%s0 + $0x30] sm:$0xf]
  %v70 = vld [vmem:[%s0 + $0x34] sm:$0xf]
  %v71 = vld [vmem:[%s0 + $0x38] sm:$0xf]
  %v72 = vld [vmem:[%s0 + $0x3c] sm:$0xf]
  %v73 = vld [vmem:[%s1] sm:$0xf]
  %v74 = vld [vmem:[%s1 + $0x4] sm:$0xf]
  %v75 = vld [vmem:[%s1 + $0x8] sm:$0xf]
  %v76 = vld [vmem:[%s1 + $0xc] sm:$0xf]
  %v77 = vld [vmem:[%s1 + $0x10] sm:$0xf]
  %v78 = vld [vmem:[%s1 + $0x14] sm:$0xf]
  %v79 = vld [vmem:[%s1 + $0x18] sm:$0xf]
  %v80 = vld [vmem:[%s1 + $0x1c] sm:$0xf]
  %v81 = vld [vmem:[%s1 + $0x20] sm:$0xf]
  %v82 = vld [vmem:[%s1 + $0x24] sm:$0xf]
  %v83 = vld [vmem:[%s1 + $0x28] sm:$0xf]
  %v84 = vld [vmem:[%s1 + $0x2c] sm:$0xf]
  %v85 = vld [vmem:[%s1 + $0x30] sm:$0xf]
  %v86 = vld [vmem:[%s1 + $0x34] sm:$0xf]
  %v87 = vld [vmem:[%s1 + $0x38] sm:$0xf]
  %v88 = vld [vmem:[%s1 + $0x3c] sm:$0xf]
  %v105 = vunpack.c.l.b16 %v57
  %v106 = vunpack.c.l.b16 %v58
  %v107 = vunpack.c.l.b16 %v59
  %v108 = vunpack.c.l.b16 %v60
  %v109 = vunpack.c.l.b16 %v61
  %v110 = vunpack.c.l.b16 %v62
  %v111 = vunpack.c.l.b16 %v63
  %v112 = vunpack.c.l.b16 %v64
  %v113 = vunpack.c.l.b16 %v65
  %v114 = vunpack.c.l.b16 %v66
  %v115 = vunpack.c.l.b16 %v67
  %v116 = vunpack.c.l.b16 %v68
  %v117 = vunpack.c.l.b16 %v69
  %v118 = vunpack.c.l.b16 %v70
  %v119 = vunpack.c.l.b16 %v71
  %v120 = vunpack.c.l.b16 %v72
  %v121 = vpack.c.b16 %v106, %v105
  %v122 = vpack.c.b16 %v108, %v107
  %v123 = vpack.c.b16 %v110, %v109
  %v124 = vpack.c.b16 %v112, %v111
  %v125 = vpack.c.b16 %v114, %v113
  %v126 = vpack.c.b16 %v116, %v115
  %v127 = vpack.c.b16 %v118, %v117
  %v128 = vpack.c.b16 %v120, %v119
  %v153 = vunpack.c.l.b16 %v73
  %v154 = vunpack.c.l.b16 %v74
  %v155 = vunpack.c.l.b16 %v75
  %v156 = vunpack.c.l.b16 %v76
  %v157 = vunpack.c.l.b16 %v77
  %v158 = vunpack.c.l.b16 %v78
  %v159 = vunpack.c.l.b16 %v79
  %v160 = vunpack.c.l.b16 %v80
  %v161 = vunpack.c.l.b16 %v81
  %v162 = vunpack.c.l.b16 %v82
  %v163 = vunpack.c.l.b16 %v83
  %v164 = vunpack.c.l.b16 %v84
  %v165 = vunpack.c.l.b16 %v85
  %v166 = vunpack.c.l.b16 %v86
  %v167 = vunpack.c.l.b16 %v87
  %v168 = vunpack.c.l.b16 %v88
  %v169 = vpack.c.b16 %v154, %v153
  %v170 = vpack.c.b16 %v156, %v155
  %v171 = vpack.c.b16 %v158, %v157
  %v172 = vpack.c.b16 %v160, %v159
  %v173 = vpack.c.b16 %v162, %v161
  %v174 = vpack.c.b16 %v164, %v163
  %v175 = vpack.c.b16 %v166, %v165
  %v176 = vpack.c.b16 %v168, %v167
  %185 = vmatprep.subr.bf16.mxu0 0
  %186 = vmatpush1.bf16.msra.mxu0 %v169
  %187 = vmatprep.subr.bf16.mxu0 0
  %188 = vmatpush1.bf16.msra.mxu0 %v170
  %189 = vmatprep.subr.bf16.mxu0 0
  %190 = vmatpush1.bf16.msra.mxu0 %v171
  %191 = vmatprep.subr.bf16.mxu0 0
  %192 = vmatpush1.bf16.msra.mxu0 %v172
  %193 = vmatprep.subr.bf16.mxu0 0
  %194 = vmatpush1.bf16.msra.mxu0 %v173
  %195 = vmatprep.subr.bf16.mxu0 0
  %196 = vmatpush1.bf16.msra.mxu0 %v174
  %197 = vmatprep.subr.bf16.mxu0 0
  %198 = vmatpush1.bf16.msra.mxu0 %v175
  %199 = vmatprep.subr.bf16.mxu0 0
  %200 = vmatpush1.bf16.msra.mxu0 %v176
  %201 = vmatprep.subr.bf16.mxu0 0
  %202 = vmatpush1.bf16.msra.mxu0 0
  %203 = vmatprep.subr.bf16.mxu0 0
  %204 = vmatpush1.bf16.msra.mxu0 0
  %205 = vmatprep.subr.bf16.mxu0 0
  %206 = vmatpush1.bf16.msra.mxu0 0
  %207 = vmatprep.subr.bf16.mxu0 0
  %208 = vmatpush1.bf16.msra.mxu0 0
  %209 = vmatprep.subr.bf16.mxu0 0
  %210 = vmatpush1.bf16.msra.mxu0 0
  %211 = vmatprep.subr.bf16.mxu0 0
  %212 = vmatpush1.bf16.msra.mxu0 0
  %213 = vmatprep.subr.bf16.mxu0 0
  %214 = vmatpush1.bf16.msra.mxu0 0
  %215 = vmatprep.subr.bf16.mxu0 0
  %216 = vmatpush1.bf16.msra.mxu0 0
  %217 = vmatprep.mubr.bf16.mxu0 0
  %218 = vmatmul.mubr.bf16.gmra.mrb[0].mxu0 %v121
  %v219 = vpop.f32.mrb[0].mxu0
  %v220 = vadd.f32 0.0, %v219
  %v221 = vpop.f32.mrb[0].mxu0
  %v222 = vpop.f32.mrb[0].mxu0
  %v223 = vadd.f32 0.0, %v222
  %v224 = vpop.f32.mrb[0].mxu0
  %225 = vmatprep.mubr.bf16.mxu0 0
  %226 = vmatmul.mubr.bf16.gmra.mrb[0].mxu0 %v122
  %v227 = vpop.f32.mrb[0].mxu0
  %v228 = vadd.f32 0.0, %v227
  %v229 = vpop.f32.mrb[0].mxu0
  %v230 = vpop.f32.mrb[0].mxu0
  %v231 = vadd.f32 0.0, %v230
  %v232 = vpop.f32.mrb[0].mxu0
  %233 = vmatprep.mubr.bf16.mxu0 0
  %234 = vmatmul.mubr.bf16.gmra.mrb[0].mxu0 %v123
  %v235 = vpop.f32.mrb[0].mxu0
  %v236 = vadd.f32 0.0, %v235
  %v237 = vpop.f32.mrb[0].mxu0
  %v238 = vpop.f32.mrb[0].mxu0
  %v239 = vadd.f32 0.0, %v238
  %v240 = vpop.f32.mrb[0].mxu0
  %241 = vmatprep.mubr.bf16.mxu0 0
  %242 = vmatmul.mubr.bf16.gmra.mrb[0].mxu0 %v124
  %v243 = vpop.f32.mrb[0].mxu0
  %v244 = vadd.f32 0.0, %v243
  %v245 = vpop.f32.mrb[0].mxu0
  %v246 = vpop.f32.mrb[0].mxu0
  %v247 = vadd.f32 0.0, %v246
  %v248 = vpop.f32.mrb[0].mxu0
  %249 = vmatprep.mubr.bf16.mxu0 0
  %250 = vmatmul.mubr.bf16.gmra.mrb[0].mxu0 %v125
  %v251 = vpop.f32.mrb[0].mxu0
  %v252 = vadd.f32 0.0, %v251
  %v253 = vpop.f32.mrb[0].mxu0
  %v254 = vpop.f32.mrb[0].mxu0
  %v255 = vadd.f32 0.0, %v254
  %v256 = vpop.f32.mrb[0].mxu0
  %257 = vmatprep.mubr.bf16.mxu0 0
  %258 = vmatmul.mubr.bf16.gmra.mrb[0].mxu0 %v126
  %v259 = vpop.f32.mrb[0].mxu0
  %v260 = vadd.f32 0.0, %v259
  %v261 = vpop.f32.mrb[0].mxu0
  %v262 = vpop.f32.mrb[0].mxu0
  %v263 = vadd.f32 0.0, %v262
  %v264 = vpop.f32.mrb[0].mxu0
  %265 = vmatprep.mubr.bf16.mxu0 0
  %266 = vmatmul.mubr.bf16.gmra.mrb[0].mxu0 %v127
  %v267 = vpop.f32.mrb[0].mxu0
  %v268 = vadd.f32 0.0, %v267
  %v269 = vpop.f32.mrb[0].mxu0
  %v270 = vpop.f32.mrb[0].mxu0
  %v271 = vadd.f32 0.0, %v270
  %v272 = vpop.f32.mrb[0].mxu0
  %273 = vmatprep.mubr.bf16.mxu0 0
  %274 = vmatmul.mubr.bf16.gmra.mrb[0].mxu0 %v128
  %v275 = vpop.f32.mrb[0].mxu0
  %v276 = vadd.f32 0.0, %v275
  %v277 = vpop.f32.mrb[0].mxu0
  %v278 = vpop.f32.mrb[0].mxu0
  %v279 = vadd.f32 0.0, %v278
  %v280 = vpop.f32.mrb[0].mxu0
  %281 = vdwg.mxu0
  %v282 = vadd.f32 %v41, %v220
  %v283 = vadd.f32 %v42, %v223
  %v284 = vadd.f32 %v43, %v228
  %v285 = vadd.f32 %v44, %v231
  %v286 = vadd.f32 %v45, %v236
  %v287 = vadd.f32 %v46, %v239
  %v288 = vadd.f32 %v47, %v244
  %v289 = vadd.f32 %v48, %v247
  %v290 = vadd.f32 %v49, %v252
  %v291 = vadd.f32 %v50, %v255
  %v292 = vadd.f32 %v51, %v260
  %v293 = vadd.f32 %v52, %v263
  %v294 = vadd.f32 %v53, %v268
  %v295 = vadd.f32 %v54, %v271
  %v296 = vadd.f32 %v55, %v276
  %v297 = vadd.f32 %v56, %v279
  %298 = vst [vmem:[#allocation2] sm:$0xff] %v282
  %299 = vst [vmem:[#allocation2 + $0x8] sm:$0xff] %v283
  %300 = vst [vmem:[#allocation2 + $0x10] sm:$0xff] %v284
  %301 = vst [vmem:[#allocation2 + $0x18] sm:$0xff] %v285
  %302 = vst [vmem:[#allocation2 + $0x20] sm:$0xff] %v286
  %303 = vst [vmem:[#allocation2 + $0x28] sm:$0xff] %v287
  %304 = vst [vmem:[#allocation2 + $0x30] sm:$0xff] %v288
  %305 = vst [vmem:[#allocation2 + $0x38] sm:$0xff] %v289
  %306 = vst [vmem:[#allocation2 + $0x40] sm:$0xff] %v290
  %307 = vst [vmem:[#allocation2 + $0x48] sm:$0xff] %v291
  %308 = vst [vmem:[#allocation2 + $0x50] sm:$0xff] %v292
  %309 = vst [vmem:[#allocation2 + $0x58] sm:$0xff] %v293
  %310 = vst [vmem:[#allocation2 + $0x60] sm:$0xff] %v294
  %311 = vst [vmem:[#allocation2 + $0x68] sm:$0xff] %v295
  %312 = vst [vmem:[#allocation2 + $0x70] sm:$0xff] %v296
  %313 = vst [vmem:[#allocation2 + $0x78] sm:$0xff] %v297
  // Predicated region
  $region26: #{link_prediction_forward.2} parent=0 // pred_check
    %p314 = pneg %p21
  $region27: #{link_prediction_forward.2} parent=0 // pred_check_branch
    %316 = sbr.rel (%p314) target = $region29
  $region28: #{link_prediction_forward.2} parent=0 // pred_region
    %v317 = vld [vmem:[#allocation2] sm:$0xff]
    %v318 = vld [vmem:[#allocation2 + $0x8] sm:$0xff]
    %v319 = vld [vmem:[#allocation2 + $0x10] sm:$0xff]
    %v320 = vld [vmem:[#allocation2 + $0x18] sm:$0xff]
    %v321 = vld [vmem:[#allocation2 + $0x20] sm:$0xff]
    %v322 = vld [vmem:[#allocation2 + $0x28] sm:$0xff]
    %v323 = vld [vmem:[#allocation2 + $0x30] sm:$0xff]
    %v324 = vld [vmem:[#allocation2 + $0x38] sm:$0xff]
    %v325 = vld [vmem:[#allocation2 + $0x40] sm:$0xff]
    %v326 = vld [vmem:[#allocation2 + $0x48] sm:$0xff]
    %v327 = vld [vmem:[#allocation2 + $0x50] sm:$0xff]
    %v328 = vld [vmem:[#allocation2 + $0x58] sm:$0xff]
    %v329 = vld [vmem:[#allocation2 + $0x60] sm:$0xff]
    %v330 = vld [vmem:[#allocation2 + $0x68] sm:$0xff]
    %v331 = vld [vmem:[#allocation2 + $0x70] sm:$0xff]
    %v332 = vld [vmem:[#allocation2 + $0x78] sm:$0xff]
    %v333 = vld [vmem:[%s2] sm:$0xff]
    %v334 = vld [vmem:[%s2 + $0x8] sm:$0xff]
    %v335 = vld [vmem:[%s2 + $0x10] sm:$0xff]
    %v336 = vld [vmem:[%s2 + $0x18] sm:$0xff]
    %v337 = vld [vmem:[%s2 + $0x20] sm:$0xff]
    %v338 = vld [vmem:[%s2 + $0x28] sm:$0xff]
    %v339 = vld [vmem:[%s2 + $0x30] sm:$0xff]
    %v340 = vld [vmem:[%s2 + $0x38] sm:$0xff]
    %v341 = vld [vmem:[%s2 + $0x40] sm:$0xff]
    %v342 = vld [vmem:[%s2 + $0x48] sm:$0xff]
    %v343 = vld [vmem:[%s2 + $0x50] sm:$0xff]
    %v344 = vld [vmem:[%s2 + $0x58] sm:$0xff]
    %v345 = vld [vmem:[%s2 + $0x60] sm:$0xff]
    %v346 = vld [vmem:[%s2 + $0x68] sm:$0xff]
    %v347 = vld [vmem:[%s2 + $0x70] sm:$0xff]
    %v348 = vld [vmem:[%s2 + $0x78] sm:$0xff]
    %v349 = vpack.c.bf16 %v318, %v317
    %v350 = vpack.c.bf16 %v320, %v319
    %v351 = vpack.c.bf16 %v322, %v321
    %v352 = vpack.c.bf16 %v324, %v323
    %v353 = vpack.c.bf16 %v326, %v325
    %v354 = vpack.c.bf16 %v328, %v327
    %v355 = vpack.c.bf16 %v330, %v329
    %v356 = vpack.c.bf16 %v332, %v331
    %v357 = vld [vmem:[%s3] sm:$0xf]
    %v358 = vld [vmem:[%s3 + $0x4] sm:$0xf]
    %v359 = vld [vmem:[%s3 + $0x8] sm:$0xf]
    %v360 = vld [vmem:[%s3 + $0xc] sm:$0xf]
    %v361 = vld [vmem:[%s3 + $0x10] sm:$0xf]
    %v362 = vld [vmem:[%s3 + $0x14] sm:$0xf]
    %v363 = vld [vmem:[%s3 + $0x18] sm:$0xf]
    %v364 = vld [vmem:[%s3 + $0x1c] sm:$0xf]
    %v365 = vld [vmem:[%s3 + $0x20] sm:$0xf]
    %v366 = vld [vmem:[%s3 + $0x24] sm:$0xf]
    %v367 = vld [vmem:[%s3 + $0x28] sm:$0xf]
    %v368 = vld [vmem:[%s3 + $0x2c] sm:$0xf]
    %v369 = vld [vmem:[%s3 + $0x30] sm:$0xf]
    %v370 = vld [vmem:[%s3 + $0x34] sm:$0xf]
    %v371 = vld [vmem:[%s3 + $0x38] sm:$0xf]
    %v372 = vld [vmem:[%s3 + $0x3c] sm:$0xf]
    %v389 = vunpack.c.l.b16 %v357
    %v390 = vunpack.c.l.b16 %v358
    %v391 = vunpack.c.l.b16 %v359
    %v392 = vunpack.c.l.b16 %v360
    %v393 = vunpack.c.l.b16 %v361
    %v394 = vunpack.c.l.b16 %v362
    %v395 = vunpack.c.l.b16 %v363
    %v396 = vunpack.c.l.b16 %v364
    %v397 = vunpack.c.l.b16 %v365
    %v398 = vunpack.c.l.b16 %v366
    %v399 = vunpack.c.l.b16 %v367
    %v400 = vunpack.c.l.b16 %v368
    %v401 = vunpack.c.l.b16 %v369
    %v402 = vunpack.c.l.b16 %v370
    %v403 = vunpack.c.l.b16 %v371
    %v404 = vunpack.c.l.b16 %v372
    %v405 = vpack.c.b16 %v390, %v389
    %v406 = vpack.c.b16 %v392, %v391
    %v407 = vpack.c.b16 %v394, %v393
    %v408 = vpack.c.b16 %v396, %v395
    %v409 = vpack.c.b16 %v398, %v397
    %v410 = vpack.c.b16 %v400, %v399
    %v411 = vpack.c.b16 %v402, %v401
    %v412 = vpack.c.b16 %v404, %v403
    %421 = vmatprep.subr.bf16.mxu0 0
    %422 = vmatpush1.bf16.msra.mxu0 %v405
    %423 = vmatprep.subr.bf16.mxu0 0
    %424 = vmatpush1.bf16.msra.mxu0 %v406
    %425 = vmatprep.subr.bf16.mxu0 0
    %426 = vmatpush1.bf16.msra.mxu0 %v407
    %427 = vmatprep.subr.bf16.mxu0 0
    %428 = vmatpush1.bf16.msra.mxu0 %v408
    %429 = vmatprep.subr.bf16.mxu0 0
    %430 = vmatpush1.bf16.msra.mxu0 %v409
    %431 = vmatprep.subr.bf16.mxu0 0
    %432 = vmatpush1.bf16.msra.mxu0 %v410
    %433 = vmatprep.subr.bf16.mxu0 0
    %434 = vmatpush1.bf16.msra.mxu0 %v411
    %435 = vmatprep.subr.bf16.mxu0 0
    %436 = vmatpush1.bf16.msra.mxu0 %v412
    %437 = vmatprep.subr.bf16.mxu0 0
    %438 = vmatpush1.bf16.msra.mxu0 0
    %439 = vmatprep.subr.bf16.mxu0 0
    %440 = vmatpush1.bf16.msra.mxu0 0
    %441 = vmatprep.subr.bf16.mxu0 0
    %442 = vmatpush1.bf16.msra.mxu0 0
    %443 = vmatprep.subr.bf16.mxu0 0
    %444 = vmatpush1.bf16.msra.mxu0 0
    %445 = vmatprep.subr.bf16.mxu0 0
    %446 = vmatpush1.bf16.msra.mxu0 0
    %447 = vmatprep.subr.bf16.mxu0 0
    %448 = vmatpush1.bf16.msra.mxu0 0
    %449 = vmatprep.subr.bf16.mxu0 0
    %450 = vmatpush1.bf16.msra.mxu0 0
    %451 = vmatprep.subr.bf16.mxu0 0
    %452 = vmatpush1.bf16.msra.mxu0 0
    %453 = vmatprep.mubr.bf16.mxu0 0
    %454 = vmatmul.mubr.bf16.gmra.mrb[0].mxu0 %v349
    %v455 = vpop.f32.mrb[0].mxu0
    %v456 = vadd.f32 0.0, %v455
    %v457 = vpop.f32.mrb[0].mxu0
    %v458 = vpop.f32.mrb[0].mxu0
    %v459 = vadd.f32 0.0, %v458
    %v460 = vpop.f32.mrb[0].mxu0
    %461 = vmatprep.mubr.bf16.mxu0 0
    %462 = vmatmul.mubr.bf16.gmra.mrb[0].mxu0 %v350
    %v463 = vpop.f32.mrb[0].mxu0
    %v464 = vadd.f32 0.0, %v463
    %v465 = vpop.f32.mrb[0].mxu0
    %v466 = vpop.f32.mrb[0].mxu0
    %v467 = vadd.f32 0.0, %v466
    %v468 = vpop.f32.mrb[0].mxu0
    %469 = vmatprep.mubr.bf16.mxu0 0
    %470 = vmatmul.mubr.bf16.gmra.mrb[0].mxu0 %v351
    %v471 = vpop.f32.mrb[0].mxu0
    %v472 = vadd.f32 0.0, %v471
    %v473 = vpop.f32.mrb[0].mxu0
    %v474 = vpop.f32.mrb[0].mxu0
    %v475 = vadd.f32 0.0, %v474
    %v476 = vpop.f32.mrb[0].mxu0
    %477 = vmatprep.mubr.bf16.mxu0 0
    %478 = vmatmul.mubr.bf16.gmra.mrb[0].mxu0 %v352
    %v479 = vpop.f32.mrb[0].mxu0
    %v480 = vadd.f32 0.0, %v479
    %v481 = vpop.f32.mrb[0].mxu0
    %v482 = vpop.f32.mrb[0].mxu0
    %v483 = vadd.f32 0.0, %v482
    %v484 = vpop.f32.mrb[0].mxu0
    %485 = vmatprep.mubr.bf16.mxu0 0
    %486 = vmatmul.mubr.bf16.gmra.mrb[0].mxu0 %v353
    %v487 = vpop.f32.mrb[0].mxu0
    %v488 = vadd.f32 0.0, %v487
    %v489 = vpop.f32.mrb[0].mxu0
    %v490 = vpop.f32.mrb[0].mxu0
    %v491 = vadd.f32 0.0, %v490
    %v492 = vpop.f32.mrb[0].mxu0
    %493 = vmatprep.mubr.bf16.mxu0 0
    %494 = vmatmul.mubr.bf16.gmra.mrb[0].mxu0 %v354
    %v495 = vpop.f32.mrb[0].mxu0
    %v496 = vadd.f32 0.0, %v495
    %v497 = vpop.f32.mrb[0].mxu0
    %v498 = vpop.f32.mrb[0].mxu0
    %v499 = vadd.f32 0.0, %v498
    %v500 = vpop.f32.mrb[0].mxu0
    %501 = vmatprep.mubr.bf16.mxu0 0
    %502 = vmatmul.mubr.bf16.gmra.mrb[0].mxu0 %v355
    %v503 = vpop.f32.mrb[0].mxu0
    %v504 = vadd.f32 0.0, %v503
    %v505 = vpop.f32.mrb[0].mxu0
    %v506 = vpop.f32.mrb[0].mxu0
    %v507 = vadd.f32 0.0, %v506
    %v508 = vpop.f32.mrb[0].mxu0
    %509 = vmatprep.mubr.bf16.mxu0 0
    %510 = vmatmul.mubr.bf16.gmra.mrb[0].mxu0 %v356
    %v511 = vpop.f32.mrb[0].mxu0
    %v512 = vadd.f32 0.0, %v511
    %v513 = vpop.f32.mrb[0].mxu0
    %v514 = vpop.f32.mrb[0].mxu0
    %v515 = vadd.f32 0.0, %v514
    %v516 = vpop.f32.mrb[0].mxu0
    %517 = vdwg.mxu0
    %519 = vset.pattern.permute.xlu0 0
    %520 = vperm.xlu0 %519, %v333
    %v521 = vpop.permute.xlu0 %520
    %524 = vset.pattern.permute.xlu0 0
    %525 = vperm.xlu0 %524, %v334
    %v526 = vpop.permute.xlu0 %525
    %529 = vset.pattern.permute.xlu0 0
    %530 = vperm.xlu0 %529, %v335
    %v531 = vpop.permute.xlu0 %530
    %534 = vset.pattern.permute.xlu0 0
    %535 = vperm.xlu0 %534, %v336
    %v536 = vpop.permute.xlu0 %535
    %539 = vset.pattern.permute.xlu0 0
    %540 = vperm.xlu0 %539, %v337
    %v541 = vpop.permute.xlu0 %540
    %544 = vset.pattern.permute.xlu0 0
    %545 = vperm.xlu0 %544, %v338
    %v546 = vpop.permute.xlu0 %545
    %549 = vset.pattern.permute.xlu0 0
    %550 = vperm.xlu0 %549, %v339
    %v551 = vpop.permute.xlu0 %550
    %554 = vset.pattern.permute.xlu0 0
    %555 = vperm.xlu0 %554, %v340
    %v556 = vpop.permute.xlu0 %555
    %559 = vset.pattern.permute.xlu0 0
    %560 = vperm.xlu0 %559, %v341
    %v561 = vpop.permute.xlu0 %560
    %564 = vset.pattern.permute.xlu0 0
    %565 = vperm.xlu0 %564, %v342
    %v566 = vpop.permute.xlu0 %565
    %569 = vset.pattern.permute.xlu0 0
    %570 = vperm.xlu0 %569, %v343
    %v571 = vpop.permute.xlu0 %570
    %574 = vset.pattern.permute.xlu0 0
    %575 = vperm.xlu0 %574, %v344
    %v576 = vpop.permute.xlu0 %575
    %579 = vset.pattern.permute.xlu0 0
    %580 = vperm.xlu0 %579, %v345
    %v581 = vpop.permute.xlu0 %580
    %584 = vset.pattern.permute.xlu0 0
    %585 = vperm.xlu0 %584, %v346
    %v586 = vpop.permute.xlu0 %585
    %589 = vset.pattern.permute.xlu0 0
    %590 = vperm.xlu0 %589, %v347
    %v591 = vpop.permute.xlu0 %590
    %594 = vset.pattern.permute.xlu0 0
    %595 = vperm.xlu0 %594, %v348
    %v596 = vpop.permute.xlu0 %595
    %v598 = vmul.f32 %v456, %v521
    %v599 = vmul.f32 %v459, %v526
    %v600 = vmul.f32 %v464, %v531
    %v601 = vmul.f32 %v467, %v536
    %v602 = vmul.f32 %v472, %v541
    %v603 = vmul.f32 %v475, %v546
    %v604 = vmul.f32 %v480, %v551
    %v605 = vmul.f32 %v483, %v556
    %v606 = vmul.f32 %v488, %v561
    %v607 = vmul.f32 %v491, %v566
    %v608 = vmul.f32 %v496, %v571
    %v609 = vmul.f32 %v499, %v576
    %v610 = vmul.f32 %v504, %v581
    %v611 = vmul.f32 %v507, %v586
    %v612 = vmul.f32 %v512, %v591
    %v613 = vmul.f32 %v515, %v596
    %v614 = vld [vmem:[%s4] sm:$0x1]
    %v616 = vlaneseq
    %v617 = vshrl.u32 %v616, 7
    %v618 = vsub.s32 0, %v617
    %v619 = vrot.slane %v614, %v618
    %v621 = vadd.f32 %v598, %v619
    %v622 = vadd.f32 %v599, %v619
    %v623 = vadd.f32 %v600, %v619
    %v624 = vadd.f32 %v601, %v619
    %v625 = vadd.f32 %v602, %v619
    %v626 = vadd.f32 %v603, %v619
    %v627 = vadd.f32 %v604, %v619
    %v628 = vadd.f32 %v605, %v619
    %v629 = vadd.f32 %v606, %v619
    %v630 = vadd.f32 %v607, %v619
    %v631 = vadd.f32 %v608, %v619
    %v632 = vadd.f32 %v609, %v619
    %v633 = vadd.f32 %v610, %v619
    %v634 = vadd.f32 %v611, %v619
    %v635 = vadd.f32 %v612, %v619
    %v636 = vadd.f32 %v613, %v619
    %v637 = vmax.f32 %v621, 0.0
    %v638 = vmax.f32 %v622, 0.0
    %v639 = vmax.f32 %v623, 0.0
    %v640 = vmax.f32 %v624, 0.0
    %v641 = vmax.f32 %v625, 0.0
    %v642 = vmax.f32 %v626, 0.0
    %v643 = vmax.f32 %v627, 0.0
    %v644 = vmax.f32 %v628, 0.0
    %v645 = vmax.f32 %v629, 0.0
    %v646 = vmax.f32 %v630, 0.0
    %v647 = vmax.f32 %v631, 0.0
    %v648 = vmax.f32 %v632, 0.0
    %v649 = vmax.f32 %v633, 0.0
    %v650 = vmax.f32 %v634, 0.0
    %v651 = vmax.f32 %v635, 0.0
    %v652 = vmax.f32 %v636, 0.0
    %v653 = vmul.f32 %v637, %v521
    %v654 = vmul.f32 %v638, %v526
    %v655 = vmul.f32 %v639, %v531
    %v656 = vmul.f32 %v640, %v536
    %v657 = vmul.f32 %v641, %v541
    %v658 = vmul.f32 %v642, %v546
    %v659 = vmul.f32 %v643, %v551
    %v660 = vmul.f32 %v644, %v556
    %v661 = vmul.f32 %v645, %v561
    %v662 = vmul.f32 %v646, %v566
    %v663 = vmul.f32 %v647, %v571
    %v664 = vmul.f32 %v648, %v576
    %v665 = vmul.f32 %v649, %v581
    %v666 = vmul.f32 %v650, %v586
    %v667 = vmul.f32 %v651, %v591
    %v668 = vmul.f32 %v652, %v596
    %v669 = vpack.c.bf16 %v654, %v653
    %v670 = vpack.c.bf16 %v656, %v655
    %v671 = vpack.c.bf16 %v658, %v657
    %v672 = vpack.c.bf16 %v660, %v659
    %v673 = vpack.c.bf16 %v662, %v661
    %v674 = vpack.c.bf16 %v664, %v663
    %v675 = vpack.c.bf16 %v666, %v665
    %v676 = vpack.c.bf16 %v668, %v667
    %v685 = vunpack.c.l.b16 %v669
    %v686 = vunpack.c.h.b16 %v669
    %v687 = vunpack.c.l.b16 %v670
    %v688 = vunpack.c.h.b16 %v670
    %v689 = vunpack.c.l.b16 %v671
    %v690 = vunpack.c.h.b16 %v671
    %v691 = vunpack.c.l.b16 %v672
    %v692 = vunpack.c.h.b16 %v672
    %v693 = vunpack.c.l.b16 %v673
    %v694 = vunpack.c.h.b16 %v673
    %v695 = vunpack.c.l.b16 %v674
    %v696 = vunpack.c.h.b16 %v674
    %v697 = vunpack.c.l.b16 %v675
    %v698 = vunpack.c.h.b16 %v675
    %v699 = vunpack.c.l.b16 %v676
    %v700 = vunpack.c.h.b16 %v676
    %v701 = vpack.c.b16 %v685, %v685
    %v702 = vpack.c.b16 %v686, %v686
    %v703 = vpack.c.b16 %v687, %v687
    %v704 = vpack.c.b16 %v688, %v688
    %v705 = vpack.c.b16 %v689, %v689
    %v706 = vpack.c.b16 %v690, %v690
    %v707 = vpack.c.b16 %v691, %v691
    %v708 = vpack.c.b16 %v692, %v692
    %v709 = vpack.c.b16 %v693, %v693
    %v710 = vpack.c.b16 %v694, %v694
    %v711 = vpack.c.b16 %v695, %v695
    %v712 = vpack.c.b16 %v696, %v696
    %v713 = vpack.c.b16 %v697, %v697
    %v714 = vpack.c.b16 %v698, %v698
    %v715 = vpack.c.b16 %v699, %v699
    %v716 = vpack.c.b16 %v700, %v700
    %733 = vst [vmem:[%s5] sm:$0xf] %v701
    %734 = vst [vmem:[%s5 + $0x4] sm:$0xf] %v702
    %735 = vst [vmem:[%s5 + $0x8] sm:$0xf] %v703
    %736 = vst [vmem:[%s5 + $0xc] sm:$0xf] %v704
    %737 = vst [vmem:[%s5 + $0x10] sm:$0xf] %v705
    %738 = vst [vmem:[%s5 + $0x14] sm:$0xf] %v706
    %739 = vst [vmem:[%s5 + $0x18] sm:$0xf] %v707
    %740 = vst [vmem:[%s5 + $0x1c] sm:$0xf] %v708
    %741 = vst [vmem:[%s5 + $0x20] sm:$0xf] %v709
    %742 = vst [vmem:[%s5 + $0x24] sm:$0xf] %v710
    %743 = vst [vmem:[%s5 + $0x28] sm:$0xf] %v711
    %744 = vst [vmem:[%s5 + $0x2c] sm:$0xf] %v712
    %745 = vst [vmem:[%s5 + $0x30] sm:$0xf] %v713
    %746 = vst [vmem:[%s5 + $0x34] sm:$0xf] %v714
    %747 = vst [vmem:[%s5 + $0x38] sm:$0xf] %v715
    %748 = vst [vmem:[%s5 + $0x3c] sm:$0xf] %v716
  $region29: #{link_prediction_forward.2} parent=0 // pred_fallthru
    _
  // Predicated region
  $region30: #{link_prediction_forward.2} parent=0 // pred_check
    _
  $region31: #{link_prediction_forward.2} parent=0 // pred_check_branch
    %750 = sbr.rel (0) target = $region33
  $region32: #{link_prediction_forward.2} parent=0 // pred_region
    _
  $region33: #{link_prediction_forward.2} parent=0 // pred_fallthru
    _
  // Predicated region
  $region34: #{link_prediction_forward.2} parent=0 // pred_check
    _
  $region35: #{link_prediction_forward.2} parent=0 // pred_check_branch
    %752 = sbr.rel (0) target = $region37
  $region36: #{link_prediction_forward.2} parent=0 // pred_region
    _
  $region37: #{link_prediction_forward.2} parent=0 // pred_fallthru
    _

// kernel: link_prediction_forward.3
$region0: #{link_prediction_forward.3}
  #allocation0 [shape = 'u32[]', space=smem, size = 0x4, offset = 0x4, fixed_abs, tag = 'smem constant byte address 0x4 - core index']
  #allocation1 [shape = 'u32[144,128]{1,0:T(1,128)}', space=vmem, size = 0x12000, scoped, tag = 'internal scratch']
  #allocation2 [shape = 'f32[128,128]{1,0:T(8,128)}', space=vmem, size = 0x10000, scoped, tag = 'scratch operand']
  %s0 = inlined_call_operand.vmem [shape: bf16[128,128], index: 0, kind: input, shape index: {}]
  %s1 = inlined_call_operand.vmem [shape: bf16[128,128], index: 1, kind: input, shape index: {}]
  %s2 = inlined_call_operand.vmem [shape: f32[128,1], index: 2, kind: input, shape index: {}]
  %s3 = inlined_call_operand.vmem [shape: bf16[128,128], index: 3, kind: input, shape index: {}]
  %s4 = inlined_call_operand.vmem [shape: f32[1,128], index: 4, kind: input, shape index: {}]
  %s5 = inlined_call_operand.vmem [shape: f32[128,128], index: 5, kind: output, shape index: {}]
  %s6 = sld [smem:[#allocation0]]
  $region38: #{link_prediction_forward.3} parent=0
    _
  %s8 = ssub.s32 1, %s6
  %s9 = scalar_select 0, %s8, %s6
  // Predicated region
  $region2: #{link_prediction_forward.3} parent=0 // pred_check
    _
  $region3: #{link_prediction_forward.3} parent=0 // pred_check_branch
    %11 = sbr.rel (0) target = $region5
  $region4: #{link_prediction_forward.3} parent=0 // pred_region
    _
  $region5: #{link_prediction_forward.3} parent=0 // pred_fallthru
    _
  // Predicated region
  $region6: #{link_prediction_forward.3} parent=0 // pred_check
    _
  $region7: #{link_prediction_forward.3} parent=0 // pred_check_branch
    %13 = sbr.rel (0) target = $region9
  $region8: #{link_prediction_forward.3} parent=0 // pred_region
    _
  $region9: #{link_prediction_forward.3} parent=0 // pred_fallthru
    _
  // Predicated region
  $region10: #{link_prediction_forward.3} parent=0 // pred_check
    _
  $region11: #{link_prediction_forward.3} parent=0 // pred_check_branch
    %15 = sbr.rel (0) target = $region13
  $region12: #{link_prediction_forward.3} parent=0 // pred_region
    _
  $region13: #{link_prediction_forward.3} parent=0 // pred_fallthru
    _
  // Predicated region
  $region14: #{link_prediction_forward.3} parent=0 // pred_check
    _
  $region15: #{link_prediction_forward.3} parent=0 // pred_check_branch
    %17 = sbr.rel (0) target = $region17
  $region16: #{link_prediction_forward.3} parent=0 // pred_region
    _
  $region17: #{link_prediction_forward.3} parent=0 // pred_fallthru
    _
  // Predicated region
  $region18: #{link_prediction_forward.3} parent=0 // pred_check
    _
  $region19: #{link_prediction_forward.3} parent=0 // pred_check_branch
    %19 = sbr.rel (0) target = $region21
  $region20: #{link_prediction_forward.3} parent=0 // pred_region
    _
  $region21: #{link_prediction_forward.3} parent=0 // pred_fallthru
    _
  %p21 = scmp.eq.s32.totalorder 0, 0
  // Predicated region
  $region22: #{link_prediction_forward.3} parent=0 // pred_check
    %p22 = pneg %p21
  $region23: #{link_prediction_forward.3} parent=0 // pred_check_branch
    %24 = sbr.rel (%p22) target = $region25
  $region24: #{link_prediction_forward.3} parent=0 // pred_region
    %25 = vst [vmem:[#allocation2] sm:$0xff] 0.0
    %26 = vst [vmem:[#allocation2 + $0x8] sm:$0xff] 0.0
    %27 = vst [vmem:[#allocation2 + $0x10] sm:$0xff] 0.0
    %28 = vst [vmem:[#allocation2 + $0x18] sm:$0xff] 0.0
    %29 = vst [vmem:[#allocation2 + $0x20] sm:$0xff] 0.0
    %30 = vst [vmem:[#allocation2 + $0x28] sm:$0xff] 0.0
    %31 = vst [vmem:[#allocation2 + $0x30] sm:$0xff] 0.0
    %32 = vst [vmem:[#allocation2 + $0x38] sm:$0xff] 0.0
    %33 = vst [vmem:[#allocation2 + $0x40] sm:$0xff] 0.0
    %34 = vst [vmem:[#allocation2 + $0x48] sm:$0xff] 0.0
    %35 = vst [vmem:[#allocation2 + $0x50] sm:$0xff] 0.0
    %36 = vst [vmem:[#allocation2 + $0x58] sm:$0xff] 0.0
    %37 = vst [vmem:[#allocation2 + $0x60] sm:$0xff] 0.0
    %38 = vst [vmem:[#allocation2 + $0x68] sm:$0xff] 0.0
    %39 = vst [vmem:[#allocation2 + $0x70] sm:$0xff] 0.0
    %40 = vst [vmem:[#allocation2 + $0x78] sm:$0xff] 0.0
  $region25: #{link_prediction_forward.3} parent=0 // pred_fallthru
    _
  %v41 = vld [vmem:[#allocation2] sm:$0xff]
  %v42 = vld [vmem:[#allocation2 + $0x8] sm:$0xff]
  %v43 = vld [vmem:[#allocation2 + $0x10] sm:$0xff]
  %v44 = vld [vmem:[#allocation2 + $0x18] sm:$0xff]
  %v45 = vld [vmem:[#allocation2 + $0x20] sm:$0xff]
  %v46 = vld [vmem:[#allocation2 + $0x28] sm:$0xff]
  %v47 = vld [vmem:[#allocation2 + $0x30] sm:$0xff]
  %v48 = vld [vmem:[#allocation2 + $0x38] sm:$0xff]
  %v49 = vld [vmem:[#allocation2 + $0x40] sm:$0xff]
  %v50 = vld [vmem:[#allocation2 + $0x48] sm:$0xff]
  %v51 = vld [vmem:[#allocation2 + $0x50] sm:$0xff]
  %v52 = vld [vmem:[#allocation2 + $0x58] sm:$0xff]
  %v53 = vld [vmem:[#allocation2 + $0x60] sm:$0xff]
  %v54 = vld [vmem:[#allocation2 + $0x68] sm:$0xff]
  %v55 = vld [vmem:[#allocation2 + $0x70] sm:$0xff]
  %v56 = vld [vmem:[#allocation2 + $0x78] sm:$0xff]
  %v57 = vld [vmem:[%s0] sm:$0xf]
  %v58 = vld [vmem:[%s0 + $0x4] sm:$0xf]
  %v59 = vld [vmem:[%s0 + $0x8] sm:$0xf]
  %v60 = vld [vmem:[%s0 + $0xc] sm:$0xf]
  %v61 = vld [vmem:[%s0 + $0x10] sm:$0xf]
  %v62 = vld [vmem:[%s0 + $0x14] sm:$0xf]
  %v63 = vld [vmem:[%s0 + $0x18] sm:$0xf]
  %v64 = vld [vmem:[%s0 + $0x1c] sm:$0xf]
  %v65 = vld [vmem:[%s0 + $0x20] sm:$0xf]
  %v66 = vld [vmem:[%s0 + $0x24] sm:$0xf]
  %v67 = vld [vmem:[%s0 + $0x28] sm:$0xf]
  %v68 = vld [vmem:[%s0 + $0x2c] sm:$0xf]
  %v69 = vld [vmem:[%s0 + $0x30] sm:$0xf]
  %v70 = vld [vmem:[%s0 + $0x34] sm:$0xf]
  %v71 = vld [vmem:[%s0 + $0x38] sm:$0xf]
  %v72 = vld [vmem:[%s0 + $0x3c] sm:$0xf]
  %v73 = vld [vmem:[%s1] sm:$0xf]
  %v74 = vld [vmem:[%s1 + $0x4] sm:$0xf]
  %v75 = vld [vmem:[%s1 + $0x8] sm:$0xf]
  %v76 = vld [vmem:[%s1 + $0xc] sm:$0xf]
  %v77 = vld [vmem:[%s1 + $0x10] sm:$0xf]
  %v78 = vld [vmem:[%s1 + $0x14] sm:$0xf]
  %v79 = vld [vmem:[%s1 + $0x18] sm:$0xf]
  %v80 = vld [vmem:[%s1 + $0x1c] sm:$0xf]
  %v81 = vld [vmem:[%s1 + $0x20] sm:$0xf]
  %v82 = vld [vmem:[%s1 + $0x24] sm:$0xf]
  %v83 = vld [vmem:[%s1 + $0x28] sm:$0xf]
  %v84 = vld [vmem:[%s1 + $0x2c] sm:$0xf]
  %v85 = vld [vmem:[%s1 + $0x30] sm:$0xf]
  %v86 = vld [vmem:[%s1 + $0x34] sm:$0xf]
  %v87 = vld [vmem:[%s1 + $0x38] sm:$0xf]
  %v88 = vld [vmem:[%s1 + $0x3c] sm:$0xf]
  %v105 = vunpack.c.l.b16 %v57
  %v106 = vunpack.c.l.b16 %v58
  %v107 = vunpack.c.l.b16 %v59
  %v108 = vunpack.c.l.b16 %v60
  %v109 = vunpack.c.l.b16 %v61
  %v110 = vunpack.c.l.b16 %v62
  %v111 = vunpack.c.l.b16 %v63
  %v112 = vunpack.c.l.b16 %v64
  %v113 = vunpack.c.l.b16 %v65
  %v114 = vunpack.c.l.b16 %v66
  %v115 = vunpack.c.l.b16 %v67
  %v116 = vunpack.c.l.b16 %v68
  %v117 = vunpack.c.l.b16 %v69
  %v118 = vunpack.c.l.b16 %v70
  %v119 = vunpack.c.l.b16 %v71
  %v120 = vunpack.c.l.b16 %v72
  %v121 = vpack.c.b16 %v106, %v105
  %v122 = vpack.c.b16 %v108, %v107
  %v123 = vpack.c.b16 %v110, %v109
  %v124 = vpack.c.b16 %v112, %v111
  %v125 = vpack.c.b16 %v114, %v113
  %v126 = vpack.c.b16 %v116, %v115
  %v127 = vpack.c.b16 %v118, %v117
  %v128 = vpack.c.b16 %v120, %v119
  %v153 = vunpack.c.l.b16 %v73
  %v154 = vunpack.c.l.b16 %v74
  %v155 = vunpack.c.l.b16 %v75
  %v156 = vunpack.c.l.b16 %v76
  %v157 = vunpack.c.l.b16 %v77
  %v158 = vunpack.c.l.b16 %v78
  %v159 = vunpack.c.l.b16 %v79
  %v160 = vunpack.c.l.b16 %v80
  %v161 = vunpack.c.l.b16 %v81
  %v162 = vunpack.c.l.b16 %v82
  %v163 = vunpack.c.l.b16 %v83
  %v164 = vunpack.c.l.b16 %v84
  %v165 = vunpack.c.l.b16 %v85
  %v166 = vunpack.c.l.b16 %v86
  %v167 = vunpack.c.l.b16 %v87
  %v168 = vunpack.c.l.b16 %v88
  %v169 = vpack.c.b16 %v154, %v153
  %v170 = vpack.c.b16 %v156, %v155
  %v171 = vpack.c.b16 %v158, %v157
  %v172 = vpack.c.b16 %v160, %v159
  %v173 = vpack.c.b16 %v162, %v161
  %v174 = vpack.c.b16 %v164, %v163
  %v175 = vpack.c.b16 %v166, %v165
  %v176 = vpack.c.b16 %v168, %v167
  %185 = vmatprep.subr.bf16.mxu0 0
  %186 = vmatpush1.bf16.msra.mxu0 %v169
  %187 = vmatprep.subr.bf16.mxu0 0
  %188 = vmatpush1.bf16.msra.mxu0 %v170
  %189 = vmatprep.subr.bf16.mxu0 0
  %190 = vmatpush1.bf16.msra.mxu0 %v171
  %191 = vmatprep.subr.bf16.mxu0 0
  %192 = vmatpush1.bf16.msra.mxu0 %v172
  %193 = vmatprep.subr.bf16.mxu0 0
  %194 = vmatpush1.bf16.msra.mxu0 %v173
  %195 = vmatprep.subr.bf16.mxu0 0
  %196 = vmatpush1.bf16.msra.mxu0 %v174
  %197 = vmatprep.subr.bf16.mxu0 0
  %198 = vmatpush1.bf16.msra.mxu0 %v175
  %199 = vmatprep.subr.bf16.mxu0 0
  %200 = vmatpush1.bf16.msra.mxu0 %v176
  %201 = vmatprep.subr.bf16.mxu0 0
  %202 = vmatpush1.bf16.msra.mxu0 0
  %203 = vmatprep.subr.bf16.mxu0 0
  %204 = vmatpush1.bf16.msra.mxu0 0
  %205 = vmatprep.subr.bf16.mxu0 0
  %206 = vmatpush1.bf16.msra.mxu0 0
  %207 = vmatprep.subr.bf16.mxu0 0
  %208 = vmatpush1.bf16.msra.mxu0 0
  %209 = vmatprep.subr.bf16.mxu0 0
  %210 = vmatpush1.bf16.msra.mxu0 0
  %211 = vmatprep.subr.bf16.mxu0 0
  %212 = vmatpush1.bf16.msra.mxu0 0
  %213 = vmatprep.subr.bf16.mxu0 0
  %214 = vmatpush1.bf16.msra.mxu0 0
  %215 = vmatprep.subr.bf16.mxu0 0
  %216 = vmatpush1.bf16.msra.mxu0 0
  %217 = vmatprep.mubr.bf16.mxu0 0
  %218 = vmatmul.mubr.bf16.gmra.mrb[0].mxu0 %v121
  %v219 = vpop.f32.mrb[0].mxu0
  %v220 = vadd.f32 0.0, %v219
  %v221 = vpop.f32.mrb[0].mxu0
  %v222 = vpop.f32.mrb[0].mxu0
  %v223 = vadd.f32 0.0, %v222
  %v224 = vpop.f32.mrb[0].mxu0
  %225 = vmatprep.mubr.bf16.mxu0 0
  %226 = vmatmul.mubr.bf16.gmra.mrb[0].mxu0 %v122
  %v227 = vpop.f32.mrb[0].mxu0
  %v228 = vadd.f32 0.0, %v227
  %v229 = vpop.f32.mrb[0].mxu0
  %v230 = vpop.f32.mrb[0].mxu0
  %v231 = vadd.f32 0.0, %v230
  %v232 = vpop.f32.mrb[0].mxu0
  %233 = vmatprep.mubr.bf16.mxu0 0
  %234 = vmatmul.mubr.bf16.gmra.mrb[0].mxu0 %v123
  %v235 = vpop.f32.mrb[0].mxu0
  %v236 = vadd.f32 0.0, %v235
  %v237 = vpop.f32.mrb[0].mxu0
  %v238 = vpop.f32.mrb[0].mxu0
  %v239 = vadd.f32 0.0, %v238
  %v240 = vpop.f32.mrb[0].mxu0
  %241 = vmatprep.mubr.bf16.mxu0 0
  %242 = vmatmul.mubr.bf16.gmra.mrb[0].mxu0 %v124
  %v243 = vpop.f32.mrb[0].mxu0
  %v244 = vadd.f32 0.0, %v243
  %v245 = vpop.f32.mrb[0].mxu0
  %v246 = vpop.f32.mrb[0].mxu0
  %v247 = vadd.f32 0.0, %v246
  %v248 = vpop.f32.mrb[0].mxu0
  %249 = vmatprep.mubr.bf16.mxu0 0
  %250 = vmatmul.mubr.bf16.gmra.mrb[0].mxu0 %v125
  %v251 = vpop.f32.mrb[0].mxu0
  %v252 = vadd.f32 0.0, %v251
  %v253 = vpop.f32.mrb[0].mxu0
  %v254 = vpop.f32.mrb[0].mxu0
  %v255 = vadd.f32 0.0, %v254
  %v256 = vpop.f32.mrb[0].mxu0
  %257 = vmatprep.mubr.bf16.mxu0 0
  %258 = vmatmul.mubr.bf16.gmra.mrb[0].mxu0 %v126
  %v259 = vpop.f32.mrb[0].mxu0
  %v260 = vadd.f32 0.0, %v259
  %v261 = vpop.f32.mrb[0].mxu0
  %v262 = vpop.f32.mrb[0].mxu0
  %v263 = vadd.f32 0.0, %v262
  %v264 = vpop.f32.mrb[0].mxu0
  %265 = vmatprep.mubr.bf16.mxu0 0
  %266 = vmatmul.mubr.bf16.gmra.mrb[0].mxu0 %v127
  %v267 = vpop.f32.mrb[0].mxu0
  %v268 = vadd.f32 0.0, %v267
  %v269 = vpop.f32.mrb[0].mxu0
  %v270 = vpop.f32.mrb[0].mxu0
  %v271 = vadd.f32 0.0, %v270
  %v272 = vpop.f32.mrb[0].mxu0
  %273 = vmatprep.mubr.bf16.mxu0 0
  %274 = vmatmul.mubr.bf16.gmra.mrb[0].mxu0 %v128
  %v275 = vpop.f32.mrb[0].mxu0
  %v276 = vadd.f32 0.0, %v275
  %v277 = vpop.f32.mrb[0].mxu0
  %v278 = vpop.f32.mrb[0].mxu0
  %v279 = vadd.f32 0.0, %v278
  %v280 = vpop.f32.mrb[0].mxu0
  %281 = vdwg.mxu0
  %v282 = vadd.f32 %v41, %v220
  %v283 = vadd.f32 %v42, %v223
  %v284 = vadd.f32 %v43, %v228
  %v285 = vadd.f32 %v44, %v231
  %v286 = vadd.f32 %v45, %v236
  %v287 = vadd.f32 %v46, %v239
  %v288 = vadd.f32 %v47, %v244
  %v289 = vadd.f32 %v48, %v247
  %v290 = vadd.f32 %v49, %v252
  %v291 = vadd.f32 %v50, %v255
  %v292 = vadd.f32 %v51, %v260
  %v293 = vadd.f32 %v52, %v263
  %v294 = vadd.f32 %v53, %v268
  %v295 = vadd.f32 %v54, %v271
  %v296 = vadd.f32 %v55, %v276
  %v297 = vadd.f32 %v56, %v279
  %298 = vst [vmem:[#allocation2] sm:$0xff] %v282
  %299 = vst [vmem:[#allocation2 + $0x8] sm:$0xff] %v283
  %300 = vst [vmem:[#allocation2 + $0x10] sm:$0xff] %v284
  %301 = vst [vmem:[#allocation2 + $0x18] sm:$0xff] %v285
  %302 = vst [vmem:[#allocation2 + $0x20] sm:$0xff] %v286
  %303 = vst [vmem:[#allocation2 + $0x28] sm:$0xff] %v287
  %304 = vst [vmem:[#allocation2 + $0x30] sm:$0xff] %v288
  %305 = vst [vmem:[#allocation2 + $0x38] sm:$0xff] %v289
  %306 = vst [vmem:[#allocation2 + $0x40] sm:$0xff] %v290
  %307 = vst [vmem:[#allocation2 + $0x48] sm:$0xff] %v291
  %308 = vst [vmem:[#allocation2 + $0x50] sm:$0xff] %v292
  %309 = vst [vmem:[#allocation2 + $0x58] sm:$0xff] %v293
  %310 = vst [vmem:[#allocation2 + $0x60] sm:$0xff] %v294
  %311 = vst [vmem:[#allocation2 + $0x68] sm:$0xff] %v295
  %312 = vst [vmem:[#allocation2 + $0x70] sm:$0xff] %v296
  %313 = vst [vmem:[#allocation2 + $0x78] sm:$0xff] %v297
  // Predicated region
  $region26: #{link_prediction_forward.3} parent=0 // pred_check
    %p314 = pneg %p21
  $region27: #{link_prediction_forward.3} parent=0 // pred_check_branch
    %316 = sbr.rel (%p314) target = $region29
  $region28: #{link_prediction_forward.3} parent=0 // pred_region
    %v317 = vld [vmem:[#allocation2] sm:$0xff]
    %v318 = vld [vmem:[#allocation2 + $0x8] sm:$0xff]
    %v319 = vld [vmem:[#allocation2 + $0x10] sm:$0xff]
    %v320 = vld [vmem:[#allocation2 + $0x18] sm:$0xff]
    %v321 = vld [vmem:[#allocation2 + $0x20] sm:$0xff]
    %v322 = vld [vmem:[#allocation2 + $0x28] sm:$0xff]
    %v323 = vld [vmem:[#allocation2 + $0x30] sm:$0xff]
    %v324 = vld [vmem:[#allocation2 + $0x38] sm:$0xff]
    %v325 = vld [vmem:[#allocation2 + $0x40] sm:$0xff]
    %v326 = vld [vmem:[#allocation2 + $0x48] sm:$0xff]
    %v327 = vld [vmem:[#allocation2 + $0x50] sm:$0xff]
    %v328 = vld [vmem:[#allocation2 + $0x58] sm:$0xff]
    %v329 = vld [vmem:[#allocation2 + $0x60] sm:$0xff]
    %v330 = vld [vmem:[#allocation2 + $0x68] sm:$0xff]
    %v331 = vld [vmem:[#allocation2 + $0x70] sm:$0xff]
    %v332 = vld [vmem:[#allocation2 + $0x78] sm:$0xff]
    %v333 = vld [vmem:[%s2] sm:$0xff]
    %v334 = vld [vmem:[%s2 + $0x8] sm:$0xff]
    %v335 = vld [vmem:[%s2 + $0x10] sm:$0xff]
    %v336 = vld [vmem:[%s2 + $0x18] sm:$0xff]
    %v337 = vld [vmem:[%s2 + $0x20] sm:$0xff]
    %v338 = vld [vmem:[%s2 + $0x28] sm:$0xff]
    %v339 = vld [vmem:[%s2 + $0x30] sm:$0xff]
    %v340 = vld [vmem:[%s2 + $0x38] sm:$0xff]
    %v341 = vld [vmem:[%s2 + $0x40] sm:$0xff]
    %v342 = vld [vmem:[%s2 + $0x48] sm:$0xff]
    %v343 = vld [vmem:[%s2 + $0x50] sm:$0xff]
    %v344 = vld [vmem:[%s2 + $0x58] sm:$0xff]
    %v345 = vld [vmem:[%s2 + $0x60] sm:$0xff]
    %v346 = vld [vmem:[%s2 + $0x68] sm:$0xff]
    %v347 = vld [vmem:[%s2 + $0x70] sm:$0xff]
    %v348 = vld [vmem:[%s2 + $0x78] sm:$0xff]
    %v349 = vpack.c.bf16 %v318, %v317
    %v350 = vpack.c.bf16 %v320, %v319
    %v351 = vpack.c.bf16 %v322, %v321
    %v352 = vpack.c.bf16 %v324, %v323
    %v353 = vpack.c.bf16 %v326, %v325
    %v354 = vpack.c.bf16 %v328, %v327
    %v355 = vpack.c.bf16 %v330, %v329
    %v356 = vpack.c.bf16 %v332, %v331
    %v357 = vld [vmem:[%s3] sm:$0xf]
    %v358 = vld [vmem:[%s3 + $0x4] sm:$0xf]
    %v359 = vld [vmem:[%s3 + $0x8] sm:$0xf]
    %v360 = vld [vmem:[%s3 + $0xc] sm:$0xf]
    %v361 = vld [vmem:[%s3 + $0x10] sm:$0xf]
    %v362 = vld [vmem:[%s3 + $0x14] sm:$0xf]
    %v363 = vld [vmem:[%s3 + $0x18] sm:$0xf]
    %v364 = vld [vmem:[%s3 + $0x1c] sm:$0xf]
    %v365 = vld [vmem:[%s3 + $0x20] sm:$0xf]
    %v366 = vld [vmem:[%s3 + $0x24] sm:$0xf]
    %v367 = vld [vmem:[%s3 + $0x28] sm:$0xf]
    %v368 = vld [vmem:[%s3 + $0x2c] sm:$0xf]
    %v369 = vld [vmem:[%s3 + $0x30] sm:$0xf]
    %v370 = vld [vmem:[%s3 + $0x34] sm:$0xf]
    %v371 = vld [vmem:[%s3 + $0x38] sm:$0xf]
    %v372 = vld [vmem:[%s3 + $0x3c] sm:$0xf]
    %v389 = vunpack.c.l.b16 %v357
    %v390 = vunpack.c.l.b16 %v358
    %v391 = vunpack.c.l.b16 %v359
    %v392 = vunpack.c.l.b16 %v360
    %v393 = vunpack.c.l.b16 %v361
    %v394 = vunpack.c.l.b16 %v362
    %v395 = vunpack.c.l.b16 %v363
    %v396 = vunpack.c.l.b16 %v364
    %v397 = vunpack.c.l.b16 %v365
    %v398 = vunpack.c.l.b16 %v366
    %v399 = vunpack.c.l.b16 %v367
    %v400 = vunpack.c.l.b16 %v368
    %v401 = vunpack.c.l.b16 %v369
    %v402 = vunpack.c.l.b16 %v370
    %v403 = vunpack.c.l.b16 %v371
    %v404 = vunpack.c.l.b16 %v372
    %v405 = vpack.c.b16 %v390, %v389
    %v406 = vpack.c.b16 %v392, %v391
    %v407 = vpack.c.b16 %v394, %v393
    %v408 = vpack.c.b16 %v396, %v395
    %v409 = vpack.c.b16 %v398, %v397
    %v410 = vpack.c.b16 %v400, %v399
    %v411 = vpack.c.b16 %v402, %v401
    %v412 = vpack.c.b16 %v404, %v403
    %421 = vmatprep.subr.bf16.mxu0 0
    %422 = vmatpush1.bf16.msra.mxu0 %v405
    %423 = vmatprep.subr.bf16.mxu0 0
    %424 = vmatpush1.bf16.msra.mxu0 %v406
    %425 = vmatprep.subr.bf16.mxu0 0
    %426 = vmatpush1.bf16.msra.mxu0 %v407
    %427 = vmatprep.subr.bf16.mxu0 0
    %428 = vmatpush1.bf16.msra.mxu0 %v408
    %429 = vmatprep.subr.bf16.mxu0 0
    %430 = vmatpush1.bf16.msra.mxu0 %v409
    %431 = vmatprep.subr.bf16.mxu0 0
    %432 = vmatpush1.bf16.msra.mxu0 %v410
    %433 = vmatprep.subr.bf16.mxu0 0
    %434 = vmatpush1.bf16.msra.mxu0 %v411
    %435 = vmatprep.subr.bf16.mxu0 0
    %436 = vmatpush1.bf16.msra.mxu0 %v412
    %437 = vmatprep.subr.bf16.mxu0 0
    %438 = vmatpush1.bf16.msra.mxu0 0
    %439 = vmatprep.subr.bf16.mxu0 0
    %440 = vmatpush1.bf16.msra.mxu0 0
    %441 = vmatprep.subr.bf16.mxu0 0
    %442 = vmatpush1.bf16.msra.mxu0 0
    %443 = vmatprep.subr.bf16.mxu0 0
    %444 = vmatpush1.bf16.msra.mxu0 0
    %445 = vmatprep.subr.bf16.mxu0 0
    %446 = vmatpush1.bf16.msra.mxu0 0
    %447 = vmatprep.subr.bf16.mxu0 0
    %448 = vmatpush1.bf16.msra.mxu0 0
    %449 = vmatprep.subr.bf16.mxu0 0
    %450 = vmatpush1.bf16.msra.mxu0 0
    %451 = vmatprep.subr.bf16.mxu0 0
    %452 = vmatpush1.bf16.msra.mxu0 0
    %453 = vmatprep.mubr.bf16.mxu0 0
    %454 = vmatmul.mubr.bf16.gmra.mrb[0].mxu0 %v349
    %v455 = vpop.f32.mrb[0].mxu0
    %v456 = vadd.f32 0.0, %v455
    %v457 = vpop.f32.mrb[0].mxu0
    %v458 = vpop.f32.mrb[0].mxu0
    %v459 = vadd.f32 0.0, %v458
    %v460 = vpop.f32.mrb[0].mxu0
    %461 = vmatprep.mubr.bf16.mxu0 0
    %462 = vmatmul.mubr.bf16.gmra.mrb[0].mxu0 %v350
    %v463 = vpop.f32.mrb[0].mxu0
    %v464 = vadd.f32 0.0, %v463
    %v465 = vpop.f32.mrb[0].mxu0
    %v466 = vpop.f32.mrb[0].mxu0
    %v467 = vadd.f32 0.0, %v466
    %v468 = vpop.f32.mrb[0].mxu0
    %469 = vmatprep.mubr.bf16.mxu0 0
    %470 = vmatmul.mubr.bf16.gmra.mrb[0].mxu0 %v351
    %v471 = vpop.f32.mrb[0].mxu0
    %v472 = vadd.f32 0.0, %v471
    %v473 = vpop.f32.mrb[0].mxu0
    %v474 = vpop.f32.mrb[0].mxu0
    %v475 = vadd.f32 0.0, %v474
    %v476 = vpop.f32.mrb[0].mxu0
    %477 = vmatprep.mubr.bf16.mxu0 0
    %478 = vmatmul.mubr.bf16.gmra.mrb[0].mxu0 %v352
    %v479 = vpop.f32.mrb[0].mxu0
    %v480 = vadd.f32 0.0, %v479
    %v481 = vpop.f32.mrb[0].mxu0
    %v482 = vpop.f32.mrb[0].mxu0
    %v483 = vadd.f32 0.0, %v482
    %v484 = vpop.f32.mrb[0].mxu0
    %485 = vmatprep.mubr.bf16.mxu0 0
    %486 = vmatmul.mubr.bf16.gmra.mrb[0].mxu0 %v353
    %v487 = vpop.f32.mrb[0].mxu0
    %v488 = vadd.f32 0.0, %v487
    %v489 = vpop.f32.mrb[0].mxu0
    %v490 = vpop.f32.mrb[0].mxu0
    %v491 = vadd.f32 0.0, %v490
    %v492 = vpop.f32.mrb[0].mxu0
    %493 = vmatprep.mubr.bf16.mxu0 0
    %494 = vmatmul.mubr.bf16.gmra.mrb[0].mxu0 %v354
    %v495 = vpop.f32.mrb[0].mxu0
    %v496 = vadd.f32 0.0, %v495
    %v497 = vpop.f32.mrb[0].mxu0
    %v498 = vpop.f32.mrb[0].mxu0
    %v499 = vadd.f32 0.0, %v498
    %v500 = vpop.f32.mrb[0].mxu0
    %501 = vmatprep.mubr.bf16.mxu0 0
    %502 = vmatmul.mubr.bf16.gmra.mrb[0].mxu0 %v355
    %v503 = vpop.f32.mrb[0].mxu0
    %v504 = vadd.f32 0.0, %v503
    %v505 = vpop.f32.mrb[0].mxu0
    %v506 = vpop.f32.mrb[0].mxu0
    %v507 = vadd.f32 0.0, %v506
    %v508 = vpop.f32.mrb[0].mxu0
    %509 = vmatprep.mubr.bf16.mxu0 0
    %510 = vmatmul.mubr.bf16.gmra.mrb[0].mxu0 %v356
    %v511 = vpop.f32.mrb[0].mxu0
    %v512 = vadd.f32 0.0, %v511
    %v513 = vpop.f32.mrb[0].mxu0
    %v514 = vpop.f32.mrb[0].mxu0
    %v515 = vadd.f32 0.0, %v514
    %v516 = vpop.f32.mrb[0].mxu0
    %517 = vdwg.mxu0
    %519 = vset.pattern.permute.xlu0 0
    %520 = vperm.xlu0 %519, %v333
    %v521 = vpop.permute.xlu0 %520
    %524 = vset.pattern.permute.xlu0 0
    %525 = vperm.xlu0 %524, %v334
    %v526 = vpop.permute.xlu0 %525
    %529 = vset.pattern.permute.xlu0 0
    %530 = vperm.xlu0 %529, %v335
    %v531 = vpop.permute.xlu0 %530
    %534 = vset.pattern.permute.xlu0 0
    %535 = vperm.xlu0 %534, %v336
    %v536 = vpop.permute.xlu0 %535
    %539 = vset.pattern.permute.xlu0 0
    %540 = vperm.xlu0 %539, %v337
    %v541 = vpop.permute.xlu0 %540
    %544 = vset.pattern.permute.xlu0 0
    %545 = vperm.xlu0 %544, %v338
    %v546 = vpop.permute.xlu0 %545
    %549 = vset.pattern.permute.xlu0 0
    %550 = vperm.xlu0 %549, %v339
    %v551 = vpop.permute.xlu0 %550
    %554 = vset.pattern.permute.xlu0 0
    %555 = vperm.xlu0 %554, %v340
    %v556 = vpop.permute.xlu0 %555
    %559 = vset.pattern.permute.xlu0 0
    %560 = vperm.xlu0 %559, %v341
    %v561 = vpop.permute.xlu0 %560
    %564 = vset.pattern.permute.xlu0 0
    %565 = vperm.xlu0 %564, %v342
    %v566 = vpop.permute.xlu0 %565
    %569 = vset.pattern.permute.xlu0 0
    %570 = vperm.xlu0 %569, %v343
    %v571 = vpop.permute.xlu0 %570
    %574 = vset.pattern.permute.xlu0 0
    %575 = vperm.xlu0 %574, %v344
    %v576 = vpop.permute.xlu0 %575
    %579 = vset.pattern.permute.xlu0 0
    %580 = vperm.xlu0 %579, %v345
    %v581 = vpop.permute.xlu0 %580
    %584 = vset.pattern.permute.xlu0 0
    %585 = vperm.xlu0 %584, %v346
    %v586 = vpop.permute.xlu0 %585
    %589 = vset.pattern.permute.xlu0 0
    %590 = vperm.xlu0 %589, %v347
    %v591 = vpop.permute.xlu0 %590
    %594 = vset.pattern.permute.xlu0 0
    %595 = vperm.xlu0 %594, %v348
    %v596 = vpop.permute.xlu0 %595
    %v598 = vmul.f32 %v456, %v521
    %v599 = vmul.f32 %v459, %v526
    %v600 = vmul.f32 %v464, %v531
    %v601 = vmul.f32 %v467, %v536
    %v602 = vmul.f32 %v472, %v541
    %v603 = vmul.f32 %v475, %v546
    %v604 = vmul.f32 %v480, %v551
    %v605 = vmul.f32 %v483, %v556
    %v606 = vmul.f32 %v488, %v561
    %v607 = vmul.f32 %v491, %v566
    %v608 = vmul.f32 %v496, %v571
    %v609 = vmul.f32 %v499, %v576
    %v610 = vmul.f32 %v504, %v581
    %v611 = vmul.f32 %v507, %v586
    %v612 = vmul.f32 %v512, %v591
    %v613 = vmul.f32 %v515, %v596
    %v614 = vld [vmem:[%s4] sm:$0x1]
    %v616 = vlaneseq
    %v617 = vshrl.u32 %v616, 7
    %v618 = vsub.s32 0, %v617
    %v619 = vrot.slane %v614, %v618
    %v621 = vadd.f32 %v598, %v619
    %v622 = vadd.f32 %v599, %v619
    %v623 = vadd.f32 %v600, %v619
    %v624 = vadd.f32 %v601, %v619
    %v625 = vadd.f32 %v602, %v619
    %v626 = vadd.f32 %v603, %v619
    %v627 = vadd.f32 %v604, %v619
    %v628 = vadd.f32 %v605, %v619
    %v629 = vadd.f32 %v606, %v619
    %v630 = vadd.f32 %v607, %v619
    %v631 = vadd.f32 %v608, %v619
    %v632 = vadd.f32 %v609, %v619
    %v633 = vadd.f32 %v610, %v619
    %v634 = vadd.f32 %v611, %v619
    %v635 = vadd.f32 %v612, %v619
    %v636 = vadd.f32 %v613, %v619
    %637 = vst [vmem:[%s5] sm:$0xff] %v621
    %638 = vst [vmem:[%s5 + $0x8] sm:$0xff] %v622
    %639 = vst [vmem:[%s5 + $0x10] sm:$0xff] %v623
    %640 = vst [vmem:[%s5 + $0x18] sm:$0xff] %v624
    %641 = vst [vmem:[%s5 + $0x20] sm:$0xff] %v625
    %642 = vst [vmem:[%s5 + $0x28] sm:$0xff] %v626
    %643 = vst [vmem:[%s5 + $0x30] sm:$0xff] %v627
    %644 = vst [vmem:[%s5 + $0x38] sm:$0xff] %v628
    %645 = vst [vmem:[%s5 + $0x40] sm:$0xff] %v629
    %646 = vst [vmem:[%s5 + $0x48] sm:$0xff] %v630
    %647 = vst [vmem:[%s5 + $0x50] sm:$0xff] %v631
    %648 = vst [vmem:[%s5 + $0x58] sm:$0xff] %v632
    %649 = vst [vmem:[%s5 + $0x60] sm:$0xff] %v633
    %650 = vst [vmem:[%s5 + $0x68] sm:$0xff] %v634
    %651 = vst [vmem:[%s5 + $0x70] sm:$0xff] %v635
    %652 = vst [vmem:[%s5 + $0x78] sm:$0xff] %v636
  $region29: #{link_prediction_forward.3} parent=0 // pred_fallthru
    _
  // Predicated region
  $region30: #{link_prediction_forward.3} parent=0 // pred_check
    _
  $region31: #{link_prediction_forward.3} parent=0 // pred_check_branch
    %654 = sbr.rel (0) target = $region33
  $region32: #{link_prediction_forward.3} parent=0 // pred_region
    _
  $region33: #{link_prediction_forward.3} parent=0 // pred_fallthru
    _
  // Predicated region
  $region34: #{link_prediction_forward.3} parent=0 // pred_check
    _
  $region35: #{link_prediction_forward.3} parent=0 // pred_check_branch
    %656 = sbr.rel (0) target = $region37
  $region36: #{link_prediction_forward.3} parent=0 // pred_region
    _
  $region37: #{link_prediction_forward.3} parent=0 // pred_fallthru
    _

</llo_original>
